<compile_context>
chip_gen: v5e
topology: v5e:2x2
jax: 0.10.0
libtpu: 0.0.40
codegen_flags: <defaults>
</compile_context>

<pallas_src>
import functools

import jax
import jax.numpy as jnp
from jax.experimental import pallas as pl
from jax.experimental.pallas import tpu as pltpu


def _round_up(x, m):
    return pl.cdiv(x, m) * m


# ---------------------------------------------------------------------------
# Pallas kernel: one grid step handles `tile_m` flattened (padded) spatial
# positions.  Inside, a non-unrolled pl.loop walks 512-lane chunks; each chunk
# builds an im2col slab in VMEM and does ONE fused 4-gate MXU matmul.
#
# Layout (channels on sublanes, flattened padded spatial on lanes):
#   cs_ref   : (Ch, tile_m)          f32   cell-state tile
#   w_ref    : (4*Ch, 9*Cc_pad)      bf16  fused conv weights (gate order f,i,o,c)
#   b_ref    : (4*Ch, 1)             f32   fused bias
#   e_lo_ref : (Cc_pad, tile_m)      bf16  padded activations, this tile
#   e_hi_ref : (Cc_pad, halo)        bf16  right halo (next halo-aligned block)
#   outputs  : (Ch, tile_m) x2             new cell state / hidden state
#   e_buf    : (Cc_pad, tile_m+halo) bf16  scratch: contiguous tile|halo copy
#   slab_ref : (9*Cc_pad, chunk)     bf16  scratch: im2col slab (K axis)
# ---------------------------------------------------------------------------
def conv_lstm_kernel(cs_ref, w_ref, b_ref, e_lo_ref, e_hi_ref,
                     c_out_ref, h_out_ref, e_buf, slab_ref, *, width, chunk):
    ch, tile_m = c_out_ref.shape
    cc_pad = e_lo_ref.shape[0]
    halo = e_hi_ref.shape[1]
    wp2 = width + 2                         # row pitch of the padded image
    n_chunks = tile_m // chunk

    # Contiguous [tile | right halo] copy of the padded activations: two
    # lane-aligned stores (replaces the per-step jnp.concatenate of v2).
    e_buf[:, :tile_m] = e_lo_ref[...]
    e_buf[:, tile_m:] = e_hi_ref[...]

    @pl.loop(0, n_chunks)
    def _(q):
        base = pl.multiple_of(q * chunk, 128)
        win = e_buf[:, pl.ds(base, chunk + halo)]          # (Cc_pad, chunk+halo)

        # im2col: stack the nine shifted views along the contraction axis of
        # the persistent VMEM slab (Cc_pad == 16 -> sublane-dense bf16 tiles).
        for t in range(9):
            off = (t // 3) * wp2 + (t % 3)
            slab_ref[t * cc_pad:(t + 1) * cc_pad, :] = win[:, off:off + chunk]

        # Single fused MXU matmul producing all four gates at once (K=9*Cc_pad).
        gates = jnp.dot(w_ref[...], slab_ref[...],
                        preferred_element_type=jnp.float32) + b_ref[...]

        f = jax.nn.sigmoid(gates[0 * ch:1 * ch])
        i = jax.nn.sigmoid(gates[1 * ch:2 * ch])
        o = jax.nn.sigmoid(gates[2 * ch:3 * ch])
        c_bar = jnp.tanh(gates[3 * ch:4 * ch])

        c = f * cs_ref[:, pl.ds(base, chunk)] + i * c_bar
        h = o * jnp.tanh(c)

        c_out_ref[:, pl.ds(base, chunk)] = c.astype(c_out_ref.dtype)
        h_out_ref[:, pl.ds(base, chunk)] = h.astype(h_out_ref.dtype)


# ---------------------------------------------------------------------------
# Wrapper: NCHW <-> kernel layout plumbing + pallas_call.
# ---------------------------------------------------------------------------
def conv_lstm_forward(cell_state, hidden_state, x, params, *,
                      tile_m=2048, chunk=512, out_dtype=None):
    """cell_state/hidden_state: (N, Ch, H, W), x: (N, Cin, H, W); NCHW f32."""
    N, Cin, H, W = x.shape
    Ch = hidden_state.shape[1]
    Cc = Cin + Ch
    Cc_pad = _round_up(Cc, 16)             # bf16 sublane-dense channel dim
    out_dtype = cell_state.dtype if out_dtype is None else jnp.dtype(out_dtype)

    w_fused = params["w_fused"]            # (4*Ch, 9*Cc_pad) bf16
    b_fused = params["b_fused"]            # (4*Ch, 1) f32
    assert w_fused.shape == (4 * Ch, 9 * Cc_pad)

    # ---- layout glue (XLA ops, no compute) -------------------------------
    # torch.cat((input, hidden), dim=1), zero-pad channels to Cc_pad and H/W
    # by 1 (SAME padding of the 3x3 conv), flatten to (Cc_pad, L) with
    # channels on sublanes and padded spatial positions on lanes.  Gates are
    # computed for every padded position; the pad rows/cols are dropped at the
    # end.
    cat = jnp.concatenate([x, hidden_state], axis=1).astype(jnp.bfloat16)
    cat_p = jnp.pad(cat, ((0, 0), (0, Cc_pad - Cc), (1, 1), (1, 1)))
    L = N * (H + 2) * (W + 2)
    e = jnp.transpose(cat_p, (1, 0, 2, 3)).reshape(Cc_pad, L)

    cs_p = jnp.pad(cell_state, ((0, 0), (0, 0), (1, 1), (1, 1)))
    cs_t = jnp.transpose(cs_p, (1, 0, 2, 3)).reshape(Ch, L)

    # ---- tiling -----------------------------------------------------------
    halo = _round_up(2 * W + 6, 128)           # lane-aligned, >= max tap offset
    chunk = _round_up(max(chunk, halo), halo)  # inner chunk (multiple of halo/128)
    tile_m = _round_up(max(tile_m, chunk), chunk)
    # Clamp the tile so tiny problems are not rounded up to huge padded grids
    # and the grid stays >= 2 tiles (v7x megacore balance).
    max_useful = max(chunk, _round_up(pl.cdiv(L, 2), chunk))
    tile_m = min(tile_m, max_useful)
    n_tiles = _round_up(pl.cdiv(L, tile_m), 2)  # even grid
    L_pad = n_tiles * tile_m
    halo_blocks = tile_m // halo

    # Guard columns: the first real output's taps reach back (W+3) columns,
    # and the last tile's halo block reaches past L.
    guard_front = W + 3
    guard_back = L_pad + halo - guard_front - L
    e_guard = jnp.pad(e, ((0, 0), (guard_front, guard_back)))   # (Cc_pad, L_pad+halo)
    cs_t = jnp.pad(cs_t, ((0, 0), (0, L_pad - L)))

    grid = (n_tiles,)

    # ---- VMEM budget / cost hint ------------------------------------------
    out_bytes = jnp.dtype(out_dtype).itemsize
    vmem_bytes = (
        2 * (Ch * tile_m * 4 + Cc_pad * tile_m * 2 + Cc_pad * halo * 2
             + w_fused.size * 2 + b_fused.size * 4)          # double-buffered ins
        + 2 * 2 * Ch * tile_m * out_bytes                     # double-buffered outs
        + Cc_pad * (tile_m + halo) * 2                        # e_buf scratch
        + 9 * Cc_pad * chunk * 2)                             # im2col slab scratch
    vmem_limit = int(min(max(2 * vmem_bytes + (4 << 20), 16 << 20), 56 << 20))

    flops = 2 * L_pad * (9 * Cc_pad) * (4 * Ch)
    transcendentals = 5 * L_pad * Ch
    bytes_accessed = int(n_tiles * (tile_m + halo) * Cc_pad * 2
                         + w_fused.size * 2 + b_fused.size * 4
                         + L_pad * Ch * 4
                         + 2 * L_pad * Ch * out_bytes)

    c_t, h_t = pl.pallas_call(
        functools.partial(conv_lstm_kernel, width=W, chunk=chunk),
        out_shape=(jax.ShapeDtypeStruct((Ch, L_pad), out_dtype),
                   jax.ShapeDtypeStruct((Ch, L_pad), out_dtype)),
        grid_spec=pltpu.PrefetchScalarGridSpec(
            num_scalar_prefetch=0,
            grid=grid,
            in_specs=[
                pl.BlockSpec((Ch, tile_m), lambda i: (0, i)),             # cell state
                pl.BlockSpec((4 * Ch, 9 * Cc_pad), lambda i: (0, 0)),     # fused weights
                pl.BlockSpec((4 * Ch, 1), lambda i: (0, 0)),              # fused bias
                pl.BlockSpec((Cc_pad, tile_m), lambda i: (0, i)),         # activations
                pl.BlockSpec((Cc_pad, halo),
                             lambda i: (0, (i + 1) * halo_blocks)),       # right halo
            ],
            out_specs=[pl.BlockSpec((Ch, tile_m), lambda i: (0, i)),
                       pl.BlockSpec((Ch, tile_m), lambda i: (0, i))],
            scratch_shapes=[
                pltpu.VMEM((Cc_pad, tile_m + halo), jnp.bfloat16),        # tile|halo
                pltpu.VMEM((9 * Cc_pad, chunk), jnp.bfloat16),            # im2col slab
            ]),
        compiler_params=pltpu.CompilerParams(
            dimension_semantics=("parallel",),
            vmem_limit_bytes=vmem_limit),
        cost_estimate=pl.CostEstimate(flops=int(flops),
                                      transcendentals=int(transcendentals),
                                      bytes_accessed=bytes_accessed),
    )(cs_t, w_fused, b_fused, e_guard, e_guard)

    # ---- back to NCHW, drop pad rows/cols ---------------------------------
    # TODO(synk): skip gate compute / c,h stores for the pad rows/cols (~27%
    # waste at 16x16) by compacting the output index map to interior positions.
    # TODO(synk): for multi-timestep rollouts keep c/h (and the (Cc_pad, L)
    # activation buffer) in kernel layout between steps; only convert to NCHW
    # at sequence boundaries.
    def to_nchw(t):
        t = t[:, :L].reshape(Ch, N, H + 2, W + 2)[:, :, 1:H + 1, 1:W + 1]
        return jnp.transpose(t, (1, 0, 2, 3)).astype(cell_state.dtype)

    return to_nchw(c_t), to_nchw(h_t)


# ---------------------------------------------------------------------------
# Deterministic parameter init (torch layout (Cout, Cin, 3, 3)) + conversion
# to the fused (4*Ch, 9*Cc_pad) single-matmul layout used by the kernel.
# ---------------------------------------------------------------------------
def init_params(key, input_channels, hidden_channels):
    Cc = input_channels + hidden_channels
    Ch = hidden_channels
    Cc_pad = _round_up(Cc, 16)
    names = ("f", "i", "o", "c")
    keys = jax.random.split(key, 2 * len(names))
    torch_weights = {}
    w_gates = []
    b_gates = []
    for idx, name in enumerate(names):
        w_torch = 0.1 * jax.random.normal(keys[2 * idx], (Ch, Cc, 3, 3), jnp.float32)
        b = 0.1 * jax.random.normal(keys[2 * idx + 1], (Ch,), jnp.float32)
        torch_weights[name] = (w_torch, b)
        # (Cout, Cin, ky, kx) -> (ky, kx, Cout, Cin) -> (9, Ch, Cc) -> pad Cin
        w9 = jnp.transpose(w_torch, (2, 3, 0, 1)).reshape(9, Ch, Cc)
        w_gates.append(jnp.pad(w9, ((0, 0), (0, 0), (0, Cc_pad - Cc))))
        b_gates.append(b)
    w_all = jnp.concatenate(w_gates, axis=1)              # (9, 4*Ch, Cc_pad)
    # row = gate*Ch + out-channel, col = tap*Cc_pad + in-channel
    w_fused = jnp.transpose(w_all, (1, 0, 2)).reshape(4 * Ch, 9 * Cc_pad)
    params = {
        "w_fused": w_fused.astype(jnp.bfloat16),                        # (4Ch, 9*Cc_pad)
        "b_fused": jnp.concatenate(b_gates, axis=0).reshape(4 * Ch, 1), # (4Ch, 1) f32
    }
    return params, torch_weights


# ---------------------------------------------------------------------------
# Pure-JAX reference (mirrors the PyTorch module) for a correctness check.
# ---------------------------------------------------------------------------
def reference_forward(cell_state, hidden_state, x, torch_weights):
    cat = jnp.concatenate([x, hidden_state], axis=1)  # NCHW

    def conv(name):
        w, b = torch_weights[name]
        y = jax.lax.conv_general_dilated(
            cat, w, window_strides=(1, 1), padding="SAME",
            dimension_numbers=("NCHW", "OIHW", "NCHW"))
        return y + b[None, :, None, None]

    f = jax.nn.sigmoid(conv("f"))
    i = jax.nn.sigmoid(conv("i"))
    o = jax.nn.sigmoid(conv("o"))
    c_ = jnp.tanh(conv("c"))
    c = f * cell_state + i * c_
    h = o * jnp.tanh(c)
    return c, h


if __name__ == "__main__":
    N, Cin, Ch, H, W = 2, 4, 8, 16, 16

    key = jax.random.PRNGKey(0)
    k_x, k_h, k_c, k_p = jax.random.split(key, 4)
    x = jax.random.normal(k_x, (N, Cin, H, W), jnp.float32)
    hidden_state = jax.random.normal(k_h, (N, Ch, H, W), jnp.float32)
    cell_state = jax.random.normal(k_c, (N, Ch, H, W), jnp.float32)

    params, torch_weights = init_params(k_p, Cin, Ch)

    fwd = jax.jit(conv_lstm_forward)
    c_out, h_out = fwd(cell_state, hidden_state, x, params)
    jax.block_until_ready((c_out, h_out))

    # Sanity check vs. a pure-f32 JAX reference of the PyTorch module.
    # bf16 activations/weights on the MXU -> loosened tolerance (gating and
    # accumulation stay f32).
    c_ref, h_ref = reference_forward(cell_state, hidden_state, x, torch_weights)
    assert jnp.allclose(c_out, c_ref, atol=5e-2, rtol=5e-2), "cell state mismatch"
    assert jnp.allclose(h_out, h_ref, atol=5e-2, rtol=5e-2), "hidden state mismatch"

    print("KERNEL_OK")
</pallas_src>

<mosaic_0001>
module attributes {stable_mosaic.version = 11 : i64} {
  func.func @conv_lstm_kernel(%arg0: i32, %arg1: memref<8x512xf32, #tpu.memory_space<vmem>>, %arg2: memref<32x144xbf16, #tpu.memory_space<vmem>>, %arg3: memref<32x1xf32, #tpu.memory_space<vmem>>, %arg4: memref<16x512xbf16, #tpu.memory_space<vmem>>, %arg5: memref<16x128xbf16, #tpu.memory_space<vmem>>, %arg6: memref<8x512xf32, #tpu.memory_space<vmem>>, %arg7: memref<8x512xf32, #tpu.memory_space<vmem>>, %arg8: memref<16x640xbf16, #tpu.memory_space<vmem>>, %arg9: memref<144x512xbf16, #tpu.memory_space<vmem>>) attributes {dimension_semantics = [#tpu.dimension_semantics<parallel>], iteration_bounds = array<i64: 2>, scalar_prefetch = 0 : i64, scratch_operands = 2 : i64, tpu.core_type = #tpu.core_type<tc>, window_params = [{transform_indices = @transform_0, window_bounds = array<i64: 8, 512>}, {pipeline_mode = #tpu.pipeline_mode<synchronous>, transform_indices = @transform_1, window_bounds = array<i64: 32, 144>}, {pipeline_mode = #tpu.pipeline_mode<synchronous>, transform_indices = @transform_2, window_bounds = array<i64: 32, 1>}, {transform_indices = @transform_3, window_bounds = array<i64: 16, 512>}, {transform_indices = @transform_4, window_bounds = array<i64: 16, 128>}, {transform_indices = @transform_5, window_bounds = array<i64: 8, 512>}, {transform_indices = @transform_6, window_bounds = array<i64: 8, 512>}]} {
    %c0 = arith.constant 0 : index
    %c0_0 = arith.constant 0 : index
    %0 = vector.load %arg4[%c0, %c0_0] : memref<16x512xbf16, #tpu.memory_space<vmem>>, vector<16x512xbf16>
    %c0_1 = arith.constant 0 : index
    %c0_2 = arith.constant 0 : index
    %1 = vector.load %arg8[%c0_1, %c0_2] : memref<16x640xbf16, #tpu.memory_space<vmem>>, vector<16x512xbf16>
    tpu.vector_store %arg8[%c0_1, %c0_2], %0 {strides = array<i32>} : memref<16x640xbf16, #tpu.memory_space<vmem>>, vector<16x512xbf16>,
    %c0_3 = arith.constant 0 : index
    %c0_4 = arith.constant 0 : index
    %2 = vector.load %arg5[%c0_3, %c0_4] : memref<16x128xbf16, #tpu.memory_space<vmem>>, vector<16x128xbf16>
    %c0_5 = arith.constant 0 : index
    %c512 = arith.constant 512 : index
    %3 = vector.load %arg8[%c0_5, %c512] : memref<16x640xbf16, #tpu.memory_space<vmem>>, vector<16x128xbf16>
    tpu.vector_store %arg8[%c0_5, %c512], %2 {strides = array<i32>} : memref<16x640xbf16, #tpu.memory_space<vmem>>, vector<16x128xbf16>,
    %c0_i32 = arith.constant 0 : i32
    %c1_i32 = arith.constant 1 : i32
    %4 = arith.muli %c0_i32, %c1_i32 : i32
    %c0_i32_6 = arith.constant 0 : i32
    %5 = arith.addi %c0_i32_6, %4 : i32
    %c512_i32 = arith.constant 512 : i32
    %6 = arith.muli %5, %c512_i32 : i32
    %7 = tpu.assume_multiple %6, 128 : i32
    %c0_7 = arith.constant 0 : index
    %8 = arith.index_cast %7 : i32 to index
    %9 = vector.load %arg8[%c0_7, %8] : memref<16x640xbf16, #tpu.memory_space<vmem>>, vector<16x640xbf16>
    %10 = vector.extract_strided_slice %9 {offsets = [0, 0], sizes = [16, 512], strides = [1, 1]} : vector<16x640xbf16> to vector<16x512xbf16>
    %c0_8 = arith.constant 0 : index
    %c0_9 = arith.constant 0 : index
    %11 = vector.load %arg9[%c0_8, %c0_9] : memref<144x512xbf16, #tpu.memory_space<vmem>>, vector<16x512xbf16>
    tpu.vector_store %arg9[%c0_8, %c0_9], %10 {strides = array<i32>} : memref<144x512xbf16, #tpu.memory_space<vmem>>, vector<16x512xbf16>,
    %12 = vector.extract_strided_slice %9 {offsets = [0, 1], sizes = [16, 512], strides = [1, 1]} : vector<16x640xbf16> to vector<16x512xbf16>
    %c16 = arith.constant 16 : index
    %c0_10 = arith.constant 0 : index
    %13 = vector.load %arg9[%c16, %c0_10] : memref<144x512xbf16, #tpu.memory_space<vmem>>, vector<16x512xbf16>
    tpu.vector_store %arg9[%c16, %c0_10], %12 {strides = array<i32>} : memref<144x512xbf16, #tpu.memory_space<vmem>>, vector<16x512xbf16>,
    %14 = vector.extract_strided_slice %9 {offsets = [0, 2], sizes = [16, 512], strides = [1, 1]} : vector<16x640xbf16> to vector<16x512xbf16>
    %c32 = arith.constant 32 : index
    %c0_11 = arith.constant 0 : index
    %15 = vector.load %arg9[%c32, %c0_11] : memref<144x512xbf16, #tpu.memory_space<vmem>>, vector<16x512xbf16>
    tpu.vector_store %arg9[%c32, %c0_11], %14 {strides = array<i32>} : memref<144x512xbf16, #tpu.memory_space<vmem>>, vector<16x512xbf16>,
    %16 = vector.extract_strided_slice %9 {offsets = [0, 18], sizes = [16, 512], strides = [1, 1]} : vector<16x640xbf16> to vector<16x512xbf16>
    %c48 = arith.constant 48 : index
    %c0_12 = arith.constant 0 : index
    %17 = vector.load %arg9[%c48, %c0_12] : memref<144x512xbf16, #tpu.memory_space<vmem>>, vector<16x512xbf16>
    tpu.vector_store %arg9[%c48, %c0_12], %16 {strides = array<i32>} : memref<144x512xbf16, #tpu.memory_space<vmem>>, vector<16x512xbf16>,
    %18 = vector.extract_strided_slice %9 {offsets = [0, 19], sizes = [16, 512], strides = [1, 1]} : vector<16x640xbf16> to vector<16x512xbf16>
    %c64 = arith.constant 64 : index
    %c0_13 = arith.constant 0 : index
    %19 = vector.load %arg9[%c64, %c0_13] : memref<144x512xbf16, #tpu.memory_space<vmem>>, vector<16x512xbf16>
    tpu.vector_store %arg9[%c64, %c0_13], %18 {strides = array<i32>} : memref<144x512xbf16, #tpu.memory_space<vmem>>, vector<16x512xbf16>,
    %20 = vector.extract_strided_slice %9 {offsets = [0, 20], sizes = [16, 512], strides = [1, 1]} : vector<16x640xbf16> to vector<16x512xbf16>
    %c80 = arith.constant 80 : index
    %c0_14 = arith.constant 0 : index
    %21 = vector.load %arg9[%c80, %c0_14] : memref<144x512xbf16, #tpu.memory_space<vmem>>, vector<16x512xbf16>
    tpu.vector_store %arg9[%c80, %c0_14], %20 {strides = array<i32>} : memref<144x512xbf16, #tpu.memory_space<vmem>>, vector<16x512xbf16>,
    %22 = vector.extract_strided_slice %9 {offsets = [0, 36], sizes = [16, 512], strides = [1, 1]} : vector<16x640xbf16> to vector<16x512xbf16>
    %c96 = arith.constant 96 : index
    %c0_15 = arith.constant 0 : index
    %23 = vector.load %arg9[%c96, %c0_15] : memref<144x512xbf16, #tpu.memory_space<vmem>>, vector<16x512xbf16>
    tpu.vector_store %arg9[%c96, %c0_15], %22 {strides = array<i32>} : memref<144x512xbf16, #tpu.memory_space<vmem>>, vector<16x512xbf16>,
    %24 = vector.extract_strided_slice %9 {offsets = [0, 37], sizes = [16, 512], strides = [1, 1]} : vector<16x640xbf16> to vector<16x512xbf16>
    %c112 = arith.constant 112 : index
    %c0_16 = arith.constant 0 : index
    %25 = vector.load %arg9[%c112, %c0_16] : memref<144x512xbf16, #tpu.memory_space<vmem>>, vector<16x512xbf16>
    tpu.vector_store %arg9[%c112, %c0_16], %24 {strides = array<i32>} : memref<144x512xbf16, #tpu.memory_space<vmem>>, vector<16x512xbf16>,
    %26 = vector.extract_strided_slice %9 {offsets = [0, 38], sizes = [16, 512], strides = [1, 1]} : vector<16x640xbf16> to vector<16x512xbf16>
    %c128 = arith.constant 128 : index
    %c0_17 = arith.constant 0 : index
    %27 = vector.load %arg9[%c128, %c0_17] : memref<144x512xbf16, #tpu.memory_space<vmem>>, vector<16x512xbf16>
    tpu.vector_store %arg9[%c128, %c0_17], %26 {strides = array<i32>} : memref<144x512xbf16, #tpu.memory_space<vmem>>, vector<16x512xbf16>,
    %c0_18 = arith.constant 0 : index
    %c0_19 = arith.constant 0 : index
    %28 = vector.load %arg2[%c0_18, %c0_19] : memref<32x144xbf16, #tpu.memory_space<vmem>>, vector<32x144xbf16>
    %c0_20 = arith.constant 0 : index
    %c0_21 = arith.constant 0 : index
    %29 = vector.load %arg9[%c0_20, %c0_21] : memref<144x512xbf16, #tpu.memory_space<vmem>>, vector<144x512xbf16>
    %cst = arith.constant dense<0.000000e+00> : vector<32x512xf32>
    %30 = tpu.matmul %28, %29, %cst {dimension_numbers = #tpu.dot_dimension_numbers<[1], [0], [0], [1], [0, 0, 1, 1], [], []>} : vector<32x144xbf16>, vector<144x512xbf16>, vector<32x512xf32> -> vector<32x512xf32>
    %c0_22 = arith.constant 0 : index
    %c0_23 = arith.constant 0 : index
    %31 = vector.load %arg3[%c0_22, %c0_23] : memref<32x1xf32, #tpu.memory_space<vmem>>, vector<32x1xf32>
    %32 = vector.broadcast %31 : vector<32x1xf32> to vector<32x512xf32>
    %33 = arith.addf %30, %32 : vector<32x512xf32>
    %34 = vector.extract_strided_slice %33 {offsets = [0, 0], sizes = [8, 512], strides = [1, 1]} : vector<32x512xf32> to vector<8x512xf32>
    %35 = arith.negf %34 : vector<8x512xf32>
    %36 = math.exp %35 : vector<8x512xf32>
    %cst_24 = arith.constant 1.000000e+00 : f32
    %37 = vector.broadcast %cst_24 : f32 to vector<8x512xf32>
    %38 = arith.addf %37, %36 : vector<8x512xf32>
    %39 = arith.divf %37, %38 : vector<8x512xf32>
    %40 = vector.extract_strided_slice %33 {offsets = [8, 0], sizes = [8, 512], strides = [1, 1]} : vector<32x512xf32> to vector<8x512xf32>
    %41 = arith.negf %40 : vector<8x512xf32>
    %42 = math.exp %41 : vector<8x512xf32>
    %cst_25 = arith.constant 1.000000e+00 : f32
    %43 = vector.broadcast %cst_25 : f32 to vector<8x512xf32>
    %44 = arith.addf %43, %42 : vector<8x512xf32>
    %45 = arith.divf %43, %44 : vector<8x512xf32>
    %46 = vector.extract_strided_slice %33 {offsets = [16, 0], sizes = [8, 512], strides = [1, 1]} : vector<32x512xf32> to vector<8x512xf32>
    %47 = arith.negf %46 : vector<8x512xf32>
    %48 = math.exp %47 : vector<8x512xf32>
    %cst_26 = arith.constant 1.000000e+00 : f32
    %49 = vector.broadcast %cst_26 : f32 to vector<8x512xf32>
    %50 = arith.addf %49, %48 : vector<8x512xf32>
    %51 = arith.divf %49, %50 : vector<8x512xf32>
    %52 = vector.extract_strided_slice %33 {offsets = [24, 0], sizes = [8, 512], strides = [1, 1]} : vector<32x512xf32> to vector<8x512xf32>
    %53 = math.tanh %52 : vector<8x512xf32>
    %c0_27 = arith.constant 0 : index
    %54 = arith.index_cast %7 : i32 to index
    %55 = vector.load %arg1[%c0_27, %54] : memref<8x512xf32, #tpu.memory_space<vmem>>, vector<8x512xf32>
    %56 = arith.mulf %39, %55 : vector<8x512xf32>
    %57 = arith.mulf %45, %53 : vector<8x512xf32>
    %58 = arith.addf %56, %57 : vector<8x512xf32>
    %59 = math.tanh %58 : vector<8x512xf32>
    %60 = arith.mulf %51, %59 : vector<8x512xf32>
    %c0_28 = arith.constant 0 : index
    %61 = arith.index_cast %7 : i32 to index
    %62 = vector.load %arg6[%c0_28, %61] : memref<8x512xf32, #tpu.memory_space<vmem>>, vector<8x512xf32>
    tpu.vector_store %arg6[%c0_28, %61], %58 {strides = array<i32>} : memref<8x512xf32, #tpu.memory_space<vmem>>, vector<8x512xf32>,
    %c0_29 = arith.constant 0 : index
    %63 = arith.index_cast %7 : i32 to index
    %64 = vector.load %arg7[%c0_29, %63] : memref<8x512xf32, #tpu.memory_space<vmem>>, vector<8x512xf32>
    tpu.vector_store %arg7[%c0_29, %63], %60 {strides = array<i32>} : memref<8x512xf32, #tpu.memory_space<vmem>>, vector<8x512xf32>,
    %c1_i32_30 = arith.constant 1 : i32
    return
  }
  func.func @transform_0(%arg0: i32) -> (i32, i32) {
    %c0_i32 = arith.constant 0 : i32
    %c0_i32_0 = arith.constant 0 : i32
    return %c0_i32, %arg0 : i32, i32
  }
  func.func @transform_1(%arg0: i32) -> (i32, i32) {
    %c0_i32 = arith.constant 0 : i32
    %c0_i32_0 = arith.constant 0 : i32
    %c0_i32_1 = arith.constant 0 : i32
    return %c0_i32, %c0_i32_0 : i32, i32
  }
  func.func @transform_2(%arg0: i32) -> (i32, i32) {
    %c0_i32 = arith.constant 0 : i32
    %c0_i32_0 = arith.constant 0 : i32
    %c0_i32_1 = arith.constant 0 : i32
    return %c0_i32, %c0_i32_0 : i32, i32
  }
  func.func @transform_3(%arg0: i32) -> (i32, i32) {
    %c0_i32 = arith.constant 0 : i32
    %c0_i32_0 = arith.constant 0 : i32
    return %c0_i32, %arg0 : i32, i32
  }
  func.func @transform_4(%arg0: i32) -> (i32, i32) {
    %c1_i32 = arith.constant 1 : i32
    %0 = arith.addi %arg0, %c1_i32 : i32
    %c4_i32 = arith.constant 4 : i32
    %1 = arith.muli %0, %c4_i32 : i32
    %c0_i32 = arith.constant 0 : i32
    %c0_i32_0 = arith.constant 0 : i32
    return %c0_i32, %1 : i32, i32
  }
  func.func @transform_5(%arg0: i32) -> (i32, i32) {
    %c0_i32 = arith.constant 0 : i32
    %c0_i32_0 = arith.constant 0 : i32
    return %c0_i32, %arg0 : i32, i32
  }
  func.func @transform_6(%arg0: i32) -> (i32, i32) {
    %c0_i32 = arith.constant 0 : i32
    %c0_i32_0 = arith.constant 0 : i32
    return %c0_i32, %arg0 : i32, i32
  }
}

</mosaic_0001>

<llo_original>
// kernel: conv_lstm_forward.1
$region0: #{conv_lstm_forward.1}
  #allocation0 [shape = 'u32[]', space=smem, size = 0x4, offset = 0x4, fixed_abs, tag = 'smem constant byte address 0x4 - core index']
  #allocation1 [shape = 'u32[72,128]{1,0:T(1,128)}', space=vmem, size = 0x9000, scoped, tag = 'internal scratch']
  #allocation2 [shape = 'bf16[16,640]{1,0:T(8,128)(2,1)}', space=vmem, size = 0x5000, scoped, tag = 'scratch operand']
  #allocation3 [shape = 'bf16[144,512]{1,0:T(8,128)(2,1)}', space=vmem, size = 0x24000, scoped, tag = 'scratch operand']
  %s0 = inlined_call_operand.vmem [shape: f32[8,1024], index: 0, kind: input, shape index: {}]
  %s1 = inlined_call_operand.vmem [shape: bf16[32,144], index: 1, kind: input, shape index: {}]
  %s2 = inlined_call_operand.vmem [shape: f32[32,1], index: 2, kind: input, shape index: {}]
  %s3 = inlined_call_operand.vmem [shape: bf16[16,1152], index: 3, kind: input, shape index: {}, may-alias: {3,4}]
  %s4 = inlined_call_operand.vmem [shape: bf16[16,1152], index: 4, kind: input, shape index: {}, may-alias: {3,4}]
  %s5 = inlined_call_operand.vmem [shape: f32[8,1024], index: 5, kind: output, shape index: {0}]
  %s6 = inlined_call_operand.vmem [shape: f32[8,1024], index: 6, kind: output, shape index: {1}]
  %7 = xla_tuple %s5, %s6
  %s8 = sld [smem:[#allocation0]]
  $region168: #{conv_lstm_forward.1} parent=0
    _
  %s10 = ssub.s32 1, %s8
  %s11 = scalar_select 0, %s10, %s8
  $region1: #{conv_lstm_forward.1} parent=0
    #allocation4 [shape = 'u8[32768]{0}', space=vmem, size = 0x8000, scoped, tag = 'input window, operand 3']
    #allocation5 [shape = 'u8[8192]{0}', space=vmem, size = 0x2000, scoped, tag = 'input window, operand 4']
    loop: start=0, step=1, limit=4
    $region2: #{conv_lstm_forward.1} parent=1 // loop_pre_header
      _
    $region3: #{conv_lstm_forward.1} parent=1 // loop_header
      %s13 = sphi 0, %s17
      %p14 = scmp.ge.s32.totalorder %s13, 4
      %s23 = sphi 0, %s25
      %s26 = sphi 0, %s23
      %s27 = sphi 0, %s26
      %s43 = sphi 0, %s27
      %s47 = sphi 0, %s47
      %s49 = sphi 0, %s47
      %s50 = sphi 0, %s49
      %s64 = sphi 0, %s50
      %s68 = sphi 0, %s68
      %s70 = sphi 0, %s68
      %s71 = sphi 0, %s70
      %s85 = sphi 0, %s71
      %s91 = sphi 0, %s93
      %s94 = sphi 0, %s91
      %s95 = sphi 0, %s94
      %s111 = sphi 0, %s95
      %s121 = sphi 0, %s123
      %s124 = sphi 0, %s121
      %s125 = sphi 0, %s124
      %s141 = sphi 0, %s125
      %s147 = sphi 0, %s149
      %s150 = sphi 0, %s147
      %s151 = sphi 0, %s150
      %s167 = sphi 0, %s151
      %s173 = sphi 0, %s175
      %s176 = sphi 0, %s173
      %s177 = sphi 0, %s176
      %s193 = sphi 0, %s177
    $region4: #{conv_lstm_forward.1} parent=1 // loop_header_branch
      %16 = sbr.rel (%p14) target = $region8
    $region5: #{conv_lstm_forward.1} parent=1 // loop_body
      %s18 = ssub.s32 %s13, 1
      %s19 = ssub.s32 %s13, 2
      %s20 = sadd.s32 %s13, 1
      %s21 = ssub.s32 %s13, %s20
      %p22 = scmp.eq.s32.totalorder %s21, 0
      %s24 = sadd.s32 %s23, 1
      %s25 = scalar_select %p22, %s23, %s24
      %p28 = pneg %p22
      %p29 = scmp.eq.s32.totalorder %s13, 1
      %p30 = por %p28, %p29
      %p31 = scmp.ne.s32.totalorder %s23, %s26
      %p32 = scmp.eq.s32.totalorder %s13, 0
      %p33 = por %p31, %p32
      %p34 = scmp.ne.s32.totalorder %s23, %s26
      %p35 = scmp.eq.s32.totalorder %s18, 1
      %p36 = por %p34, %p35
      %p37 = scmp.ne.s32.totalorder %s26, %s27
      %p38 = scmp.eq.s32.totalorder %s18, 0
      %p39 = por %p37, %p38
      %p40 = scmp.ne.s32.totalorder %s26, %s27
      %p41 = scmp.eq.s32.totalorder %s19, 1
      %p42 = por %p40, %p41
      %p44 = scmp.ne.s32.totalorder %s27, %s43
      %p45 = scmp.eq.s32.totalorder %s19, 0
      %p46 = por %p44, %p45
      %s48 = sadd.s32 %s47, 1
      %p51 = scmp.eq.s32.totalorder %s13, 1
      %p52 = scmp.ne.s32.totalorder %s47, %s49
      %p53 = scmp.eq.s32.totalorder %s13, 0
      %p54 = por %p52, %p53
      %p55 = scmp.ne.s32.totalorder %s47, %s49
      %p56 = scmp.eq.s32.totalorder %s18, 1
      %p57 = por %p55, %p56
      %p58 = scmp.ne.s32.totalorder %s49, %s50
      %p59 = scmp.eq.s32.totalorder %s18, 0
      %p60 = por %p58, %p59
      %p61 = scmp.ne.s32.totalorder %s49, %s50
      %p62 = scmp.eq.s32.totalorder %s19, 1
      %p63 = por %p61, %p62
      %p65 = scmp.ne.s32.totalorder %s50, %s64
      %p66 = scmp.eq.s32.totalorder %s19, 0
      %p67 = por %p65, %p66
      %s69 = sadd.s32 %s68, 1
      %p72 = scmp.eq.s32.totalorder %s13, 1
      %p73 = scmp.ne.s32.totalorder %s68, %s70
      %p74 = scmp.eq.s32.totalorder %s13, 0
      %p75 = por %p73, %p74
      %p76 = scmp.ne.s32.totalorder %s68, %s70
      %p77 = scmp.eq.s32.totalorder %s18, 1
      %p78 = por %p76, %p77
      %p79 = scmp.ne.s32.totalorder %s70, %s71
      %p80 = scmp.eq.s32.totalorder %s18, 0
      %p81 = por %p79, %p80
      %p82 = scmp.ne.s32.totalorder %s70, %s71
      %p83 = scmp.eq.s32.totalorder %s19, 1
      %p84 = por %p82, %p83
      %p86 = scmp.ne.s32.totalorder %s71, %s85
      %p87 = scmp.eq.s32.totalorder %s19, 0
      %p88 = por %p86, %p87
      %s89 = ssub.s32 %s13, %s20
      %p90 = scmp.eq.s32.totalorder %s89, 0
      %s92 = sadd.s32 %s91, 1
      %s93 = scalar_select %p90, %s91, %s92
      %p96 = pneg %p90
      %p97 = scmp.eq.s32.totalorder %s13, 1
      %p98 = por %p96, %p97
      %p99 = scmp.ne.s32.totalorder %s91, %s94
      %p100 = scmp.eq.s32.totalorder %s13, 0
      %p101 = por %p99, %p100
      %p102 = scmp.ne.s32.totalorder %s91, %s94
      %p103 = scmp.eq.s32.totalorder %s18, 1
      %p104 = por %p102, %p103
      %p105 = scmp.ne.s32.totalorder %s94, %s95
      %p106 = scmp.eq.s32.totalorder %s18, 0
      %p107 = por %p105, %p106
      %p108 = scmp.ne.s32.totalorder %s94, %s95
      %p109 = scmp.eq.s32.totalorder %s19, 1
      %p110 = por %p108, %p109
      %p112 = scmp.ne.s32.totalorder %s95, %s111
      %p113 = scmp.eq.s32.totalorder %s19, 0
      %p114 = por %p112, %p113
      %s115 = sadd.s32 %s13, 1
      %s116 = smul.u32 %s115, 4
      %s117 = sadd.s32 %s20, 1
      %s118 = smul.u32 %s117, 4
      %s119 = ssub.s32 %s116, %s118
      %p120 = scmp.eq.s32.totalorder %s119, 0
      %s122 = sadd.s32 %s121, 1
      %s123 = scalar_select %p120, %s121, %s122
      %p126 = pneg %p120
      %p127 = scmp.eq.s32.totalorder %s13, 1
      %p128 = por %p126, %p127
      %p129 = scmp.ne.s32.totalorder %s121, %s124
      %p130 = scmp.eq.s32.totalorder %s13, 0
      %p131 = por %p129, %p130
      %p132 = scmp.ne.s32.totalorder %s121, %s124
      %p133 = scmp.eq.s32.totalorder %s18, 1
      %p134 = por %p132, %p133
      %p135 = scmp.ne.s32.totalorder %s124, %s125
      %p136 = scmp.eq.s32.totalorder %s18, 0
      %p137 = por %p135, %p136
      %p138 = scmp.ne.s32.totalorder %s124, %s125
      %p139 = scmp.eq.s32.totalorder %s19, 1
      %p140 = por %p138, %p139
      %p142 = scmp.ne.s32.totalorder %s125, %s141
      %p143 = scmp.eq.s32.totalorder %s19, 0
      %p144 = por %p142, %p143
      %s145 = ssub.s32 %s13, %s20
      %p146 = scmp.eq.s32.totalorder %s145, 0
      %s148 = sadd.s32 %s147, 1
      %s149 = scalar_select %p146, %s147, %s148
      %p152 = pneg %p146
      %p153 = scmp.eq.s32.totalorder %s13, 1
      %p154 = por %p152, %p153
      %p155 = scmp.ne.s32.totalorder %s147, %s150
      %p156 = scmp.eq.s32.totalorder %s13, 0
      %p157 = por %p155, %p156
      %p158 = scmp.ne.s32.totalorder %s147, %s150
      %p159 = scmp.eq.s32.totalorder %s18, 1
      %p160 = por %p158, %p159
      %p161 = scmp.ne.s32.totalorder %s150, %s151
      %p162 = scmp.eq.s32.totalorder %s18, 0
      %p163 = por %p161, %p162
      %p164 = scmp.ne.s32.totalorder %s150, %s151
      %p165 = scmp.eq.s32.totalorder %s19, 1
      %p166 = por %p164, %p165
      %p168 = scmp.ne.s32.totalorder %s151, %s167
      %p169 = scmp.eq.s32.totalorder %s19, 0
      %p170 = por %p168, %p169
      %s171 = ssub.s32 %s13, %s20
      %p172 = scmp.eq.s32.totalorder %s171, 0
      %s174 = sadd.s32 %s173, 1
      %s175 = scalar_select %p172, %s173, %s174
      %p178 = pneg %p172
      %p179 = scmp.eq.s32.totalorder %s13, 1
      %p180 = por %p178, %p179
      %p181 = scmp.ne.s32.totalorder %s173, %s176
      %p182 = scmp.eq.s32.totalorder %s13, 0
      %p183 = por %p181, %p182
      %p184 = scmp.ne.s32.totalorder %s173, %s176
      %p185 = scmp.eq.s32.totalorder %s18, 1
      %p186 = por %p184, %p185
      %p187 = scmp.ne.s32.totalorder %s176, %s177
      %p188 = scmp.eq.s32.totalorder %s18, 0
      %p189 = por %p187, %p188
      %p190 = scmp.ne.s32.totalorder %s176, %s177
      %p191 = scmp.eq.s32.totalorder %s19, 1
      %p192 = por %p190, %p191
      %p194 = scmp.ne.s32.totalorder %s177, %s193
      %p195 = scmp.eq.s32.totalorder %s19, 0
      %p196 = por %p194, %p195
      %p197 = scmp.le.s32.totalorder 1, %s13
      %p198 = scmp.lt.s32.totalorder %s13, 3
      %p199 = pnand %p197, %p198
      %p200 = pneg %p199
      // Predicated region
      $region9: #{conv_lstm_forward.1} parent=5 // pred_check
        _
      $region10: #{conv_lstm_forward.1} parent=5 // pred_check_branch
        %202 = sbr.rel (%p199) target = $region12
      $region11: #{conv_lstm_forward.1} parent=5 // pred_region
        %s203 = ssub.s32 %s13, 1
        // Predicated region
        $region13: #{conv_lstm_forward.1} parent=11 // pred_check
          %p204 = pneg %p60
        $region14: #{conv_lstm_forward.1} parent=11 // pred_check_branch
          %206 = sbr.rel (%p204) target = $region16
        $region15: #{conv_lstm_forward.1} parent=11 // pred_region
          _
        $region16: #{conv_lstm_forward.1} parent=11 // pred_fallthru
          _
        // Predicated region
        $region17: #{conv_lstm_forward.1} parent=11 // pred_check
          %p207 = pneg %p81
        $region18: #{conv_lstm_forward.1} parent=11 // pred_check_branch
          %209 = sbr.rel (%p207) target = $region20
        $region19: #{conv_lstm_forward.1} parent=11 // pred_region
          _
        $region20: #{conv_lstm_forward.1} parent=11 // pred_fallthru
          _
      $region12: #{conv_lstm_forward.1} parent=5 // pred_fallthru
        _
      %p210 = scmp.lt.s32.totalorder %s13, 2
      // Predicated region
      $region21: #{conv_lstm_forward.1} parent=5 // pred_check
        %p211 = pneg %p210
      $region22: #{conv_lstm_forward.1} parent=5 // pred_check_branch
        %213 = sbr.rel (%p211) target = $region24
      $region23: #{conv_lstm_forward.1} parent=5 // pred_region
        // Predicated region
        $region25: #{conv_lstm_forward.1} parent=23 // pred_check
          %p214 = pneg %p33
        $region26: #{conv_lstm_forward.1} parent=23 // pred_check_branch
          %216 = sbr.rel (%p214) target = $region28
        $region27: #{conv_lstm_forward.1} parent=23 // pred_region
          %s217 = smul.u32 4, %s13
          %p218 = scmp.lt.s32.totalorder %s217, 7
          %s219 = scalar_select %p218, %s217, 7
          %s220 = smul.addr %s219, 8
          %s221 = scalar_lea.vmem %s0, %s220
          %s222 = smul.u32 4, %s13
        $region28: #{conv_lstm_forward.1} parent=23 // pred_fallthru
          _
        // Predicated region
        $region29: #{conv_lstm_forward.1} parent=23 // pred_check
          %p223 = pneg %p101
        $region30: #{conv_lstm_forward.1} parent=23 // pred_check_branch
          %225 = sbr.rel (%p223) target = $region32
        $region31: #{conv_lstm_forward.1} parent=23 // pred_region
          %s226 = sand.u32 %s91, 1
          %s227 = sand.u32 %s91, 1
          %s228 = smul.addr %s227, 32
          %s229 = scalar_lea.vmem [#allocation4], %s228
          %s230 = smul.u32 4, %s13
          %s231 = ssub.s32 9, %s230
          %p232 = scmp.lt.s32.totalorder %s231, 4
          %s233 = scalar_select %p232, %s231, 4
          %s234 = smul.u32 8, %s233
          %p235 = scmp.ne.s32.totalorder 0, %s234
          %s236 = smul.addr %s230, 4
          %s237 = scalar_lea.vmem %s3, %s236
          %s238 = smul.u32 %s233, 4
          // Predicated region
          $region33: #{conv_lstm_forward.1} parent=31 // pred_check
            %p239 = pneg %p235
          $region34: #{conv_lstm_forward.1} parent=31 // pred_check_branch
            %241 = sbr.rel (%p239) target = $region36
          $region35: #{conv_lstm_forward.1} parent=31 // pred_region
            %p242 = scmp.lt.u32.totalorder %s238, 8
            %p243 = pneg %p242
            // Predicated region
            $region37: #{conv_lstm_forward.1} parent=35 // pred_check
              _
            $region38: #{conv_lstm_forward.1} parent=35 // pred_check_branch
              %245 = sbr.rel (%p242) target = $region40
            $region39: #{conv_lstm_forward.1} parent=35 // pred_region
              %s263 = sand.u32 %s238, 7
              %p264 = scmp.eq.s32.totalorder %s263, 0
              // Predicated region
              $region52: #{conv_lstm_forward.1} parent=39 // pred_check
                %p265 = pneg %p264
              $region53: #{conv_lstm_forward.1} parent=39 // pred_check_branch
                %267 = sbr.rel (%p265) target = $region55
              $region54: #{conv_lstm_forward.1} parent=39 // pred_region
                %s268 = sshrl.u32 %s238, 3
                %s269 = sshrl.u32 %s268, 4
                // While loop
                $region56: #{conv_lstm_forward.1} parent=54 // loop_pre_header
                  _
                $region57: #{conv_lstm_forward.1} parent=54 // loop_header
                  %s271 = sphi 0, %s273
                  %p272 = scmp.ge.s32.totalorder %s271, %s269
                  %s276 = sphi 0, %s345
                  %s277 = sphi %s237, %s348
                  %s278 = sphi %s229, %s349
                $region58: #{conv_lstm_forward.1} parent=54 // loop_header_branch
                  %275 = sbr.rel (%p272) target = $region62
                $region59: #{conv_lstm_forward.1} parent=54 // loop_body
                  %v279 = vld [vmem:[%s277] sm:$0xff]
                  %280 = vst [vmem:[%s278] sm:$0xff] %v279
                  %v281 = vld [vmem:[%s277 + $0x8] sm:$0xff]
                  %282 = vst [vmem:[%s278 + $0x8] sm:$0xff] %v281
                  %v283 = vld [vmem:[%s277 + $0x10] sm:$0xff]
                  %284 = vst [vmem:[%s278 + $0x10] sm:$0xff] %v283
                  %v285 = vld [vmem:[%s277 + $0x18] sm:$0xff]
                  %286 = vst [vmem:[%s278 + $0x18] sm:$0xff] %v285
                  %v287 = vld [vmem:[%s277 + $0x20] sm:$0xff]
                  %288 = vst [vmem:[%s278 + $0x20] sm:$0xff] %v287
                  %v289 = vld [vmem:[%s277 + $0x28] sm:$0xff]
                  %290 = vst [vmem:[%s278 + $0x28] sm:$0xff] %v289
                  %v291 = vld [vmem:[%s277 + $0x30] sm:$0xff]
                  %292 = vst [vmem:[%s278 + $0x30] sm:$0xff] %v291
                  %v293 = vld [vmem:[%s277 + $0x38] sm:$0xff]
                  %294 = vst [vmem:[%s278 + $0x38] sm:$0xff] %v293
                  %v295 = vld [vmem:[%s277 + $0x40] sm:$0xff]
                  %296 = vst [vmem:[%s278 + $0x40] sm:$0xff] %v295
                  %v297 = vld [vmem:[%s277 + $0x48] sm:$0xff]
                  %298 = vst [vmem:[%s278 + $0x48] sm:$0xff] %v297
                  %v299 = vld [vmem:[%s277 + $0x50] sm:$0xff]
                  %300 = vst [vmem:[%s278 + $0x50] sm:$0xff] %v299
                  %v301 = vld [vmem:[%s277 + $0x58] sm:$0xff]
                  %302 = vst [vmem:[%s278 + $0x58] sm:$0xff] %v301
                  %v303 = vld [vmem:[%s277 + $0x60] sm:$0xff]
                  %304 = vst [vmem:[%s278 + $0x60] sm:$0xff] %v303
                  %v305 = vld [vmem:[%s277 + $0x68] sm:$0xff]
                  %306 = vst [vmem:[%s278 + $0x68] sm:$0xff] %v305
                  %v307 = vld [vmem:[%s277 + $0x70] sm:$0xff]
                  %308 = vst [vmem:[%s278 + $0x70] sm:$0xff] %v307
                  %v309 = vld [vmem:[%s277 + $0x78] sm:$0xff]
                  %310 = vst [vmem:[%s278 + $0x78] sm:$0xff] %v309
                  %v311 = vld [vmem:[%s277 + $0x24] sm:$0xff]
                  %312 = vst [vmem:[%s278 + $0x10] sm:$0xff] %v311
                  %v313 = vld [vmem:[%s277 + $0x2c] sm:$0xff]
                  %314 = vst [vmem:[%s278 + $0x18] sm:$0xff] %v313
                  %v315 = vld [vmem:[%s277 + $0x34] sm:$0xff]
                  %316 = vst [vmem:[%s278 + $0x20] sm:$0xff] %v315
                  %v317 = vld [vmem:[%s277 + $0x3c] sm:$0xff]
                  %318 = vst [vmem:[%s278 + $0x28] sm:$0xff] %v317
                  %v319 = vld [vmem:[%s277 + $0x44] sm:$0xff]
                  %320 = vst [vmem:[%s278 + $0x30] sm:$0xff] %v319
                  %v321 = vld [vmem:[%s277 + $0x4c] sm:$0xff]
                  %322 = vst [vmem:[%s278 + $0x38] sm:$0xff] %v321
                  %v323 = vld [vmem:[%s277 + $0x54] sm:$0xff]
                  %324 = vst [vmem:[%s278 + $0x40] sm:$0xff] %v323
                  %v325 = vld [vmem:[%s277 + $0x5c] sm:$0xff]
                  %326 = vst [vmem:[%s278 + $0x48] sm:$0xff] %v325
                  %v327 = vld [vmem:[%s277 + $0x64] sm:$0xff]
                  %328 = vst [vmem:[%s278 + $0x50] sm:$0xff] %v327
                  %v329 = vld [vmem:[%s277 + $0x6c] sm:$0xff]
                  %330 = vst [vmem:[%s278 + $0x58] sm:$0xff] %v329
                  %v331 = vld [vmem:[%s277 + $0x74] sm:$0xff]
                  %332 = vst [vmem:[%s278 + $0x60] sm:$0xff] %v331
                  %v333 = vld [vmem:[%s277 + $0x7c] sm:$0xff]
                  %334 = vst [vmem:[%s278 + $0x68] sm:$0xff] %v333
                  %v335 = vld [vmem:[%s277 + $0x84] sm:$0xff]
                  %336 = vst [vmem:[%s278 + $0x70] sm:$0xff] %v335
                  %v337 = vld [vmem:[%s277 + $0x8c] sm:$0xff]
                  %338 = vst [vmem:[%s278 + $0x78] sm:$0xff] %v337
                  %v339 = vld [vmem:[%s277 + $0x94] sm:$0xff]
                  %340 = vst [vmem:[%s278 + $0x80] sm:$0xff] %v339
                  %v341 = vld [vmem:[%s277 + $0x9c] sm:$0xff]
                  %342 = vst [vmem:[%s278 + $0x88] sm:$0xff] %v341
                  %s343 = sadd.s32 1, %s276
                  %p344 = scmp.ge.s32.totalorder %s343, %s269
                  %s345 = scalar_select %p344, 0, %s343
                  %s346 = smul.u32 %s345, 128
                  %s347 = smul.u32 %s345, 128
                  %s348 = scalar_lea.vmem %s237, %s346
                  %s349 = scalar_lea.vmem %s229, %s347 [#allocation4]
                $region60: #{conv_lstm_forward.1} parent=54 // loop_footer
                  %s273 = sadd.s32 %s271, 1
                $region61: #{conv_lstm_forward.1} parent=54 // loop_footer_branch
                  %270 = sbr.rel target = $region57
                $region62: #{conv_lstm_forward.1} parent=54 // loop_exit
                  _
                %s350 = sshrl.u32 %s268, 4
                %s351 = sand.u32 %s268, 15
                %s352 = smul.u32 %s350, 16
                %s353 = smul.u32 8, %s352
                %s354 = scalar_lea.vmem %s237, %s353
                %s355 = smul.u32 8, %s352
                %s356 = scalar_lea.vmem %s229, %s355 [#allocation4]
                // While loop
                $region63: #{conv_lstm_forward.1} parent=54 // loop_pre_header
                  _
                $region64: #{conv_lstm_forward.1} parent=54 // loop_header
                  %s358 = sphi 0, %s360
                  %p359 = scmp.ge.s32.totalorder %s358, %s351
                  %s363 = sphi 0, %s372
                  %s364 = sphi %s354, %s375
                  %s365 = sphi %s356, %s376
                $region65: #{conv_lstm_forward.1} parent=54 // loop_header_branch
                  %362 = sbr.rel (%p359) target = $region69
                $region66: #{conv_lstm_forward.1} parent=54 // loop_body
                  %v366 = vld [vmem:[%s364] sm:$0xff]
                  %367 = vst [vmem:[%s365] sm:$0xff] %v366
                  %v368 = vld [vmem:[%s364 + $0x24] sm:$0xff]
                  %369 = vst [vmem:[%s365 + $0x10] sm:$0xff] %v368
                  %s370 = sadd.s32 1, %s363
                  %p371 = scmp.ge.s32.totalorder %s370, %s351
                  %s372 = scalar_select %p371, 0, %s370
                  %s373 = smul.u32 %s372, 8
                  %s374 = smul.u32 %s372, 8
                  %s375 = scalar_lea.vmem %s354, %s373
                  %s376 = scalar_lea.vmem %s356, %s374 [#allocation4]
                $region67: #{conv_lstm_forward.1} parent=54 // loop_footer
                  %s360 = sadd.s32 %s358, 1
                $region68: #{conv_lstm_forward.1} parent=54 // loop_footer_branch
                  %357 = sbr.rel target = $region64
                $region69: #{conv_lstm_forward.1} parent=54 // loop_exit
                  _
              $region55: #{conv_lstm_forward.1} parent=39 // pred_fallthru
                _
              %p377 = pneg %p264
              // Predicated region
              $region70: #{conv_lstm_forward.1} parent=39 // pred_check
                _
              $region71: #{conv_lstm_forward.1} parent=39 // pred_check_branch
                %379 = sbr.rel (%p264) target = $region73
              $region72: #{conv_lstm_forward.1} parent=39 // pred_region
                %s380 = sand.u32 %s238, 7
                %s381 = ssub.s32 %s238, %s380
                %s382 = scalar_lea.vmem %s237, %s381
                %s383 = ssub.s32 %s238, %s380
                %s384 = scalar_lea.vmem %s229, %s383 [#allocation4]
                %s385 = sshrl.u32 %s238, 3
                %s386 = sshrl.u32 %s385, 4
                // While loop
                $region74: #{conv_lstm_forward.1} parent=72 // loop_pre_header
                  _
                $region75: #{conv_lstm_forward.1} parent=72 // loop_header
                  %s388 = sphi 0, %s390
                  %p389 = scmp.ge.s32.totalorder %s388, %s386
                  %s393 = sphi 0, %s462
                  %s394 = sphi %s237, %s465
                  %s395 = sphi %s229, %s466
                $region76: #{conv_lstm_forward.1} parent=72 // loop_header_branch
                  %392 = sbr.rel (%p389) target = $region80
                $region77: #{conv_lstm_forward.1} parent=72 // loop_body
                  %v396 = vld [vmem:[%s394] sm:$0xff]
                  %397 = vst [vmem:[%s395] sm:$0xff] %v396
                  %v398 = vld [vmem:[%s394 + $0x8] sm:$0xff]
                  %399 = vst [vmem:[%s395 + $0x8] sm:$0xff] %v398
                  %v400 = vld [vmem:[%s394 + $0x10] sm:$0xff]
                  %401 = vst [vmem:[%s395 + $0x10] sm:$0xff] %v400
                  %v402 = vld [vmem:[%s394 + $0x18] sm:$0xff]
                  %403 = vst [vmem:[%s395 + $0x18] sm:$0xff] %v402
                  %v404 = vld [vmem:[%s394 + $0x20] sm:$0xff]
                  %405 = vst [vmem:[%s395 + $0x20] sm:$0xff] %v404
                  %v406 = vld [vmem:[%s394 + $0x28] sm:$0xff]
                  %407 = vst [vmem:[%s395 + $0x28] sm:$0xff] %v406
                  %v408 = vld [vmem:[%s394 + $0x30] sm:$0xff]
                  %409 = vst [vmem:[%s395 + $0x30] sm:$0xff] %v408
                  %v410 = vld [vmem:[%s394 + $0x38] sm:$0xff]
                  %411 = vst [vmem:[%s395 + $0x38] sm:$0xff] %v410
                  %v412 = vld [vmem:[%s394 + $0x40] sm:$0xff]
                  %413 = vst [vmem:[%s395 + $0x40] sm:$0xff] %v412
                  %v414 = vld [vmem:[%s394 + $0x48] sm:$0xff]
                  %415 = vst [vmem:[%s395 + $0x48] sm:$0xff] %v414
                  %v416 = vld [vmem:[%s394 + $0x50] sm:$0xff]
                  %417 = vst [vmem:[%s395 + $0x50] sm:$0xff] %v416
                  %v418 = vld [vmem:[%s394 + $0x58] sm:$0xff]
                  %419 = vst [vmem:[%s395 + $0x58] sm:$0xff] %v418
                  %v420 = vld [vmem:[%s394 + $0x60] sm:$0xff]
                  %421 = vst [vmem:[%s395 + $0x60] sm:$0xff] %v420
                  %v422 = vld [vmem:[%s394 + $0x68] sm:$0xff]
                  %423 = vst [vmem:[%s395 + $0x68] sm:$0xff] %v422
                  %v424 = vld [vmem:[%s394 + $0x70] sm:$0xff]
                  %425 = vst [vmem:[%s395 + $0x70] sm:$0xff] %v424
                  %v426 = vld [vmem:[%s394 + $0x78] sm:$0xff]
                  %427 = vst [vmem:[%s395 + $0x78] sm:$0xff] %v426
                  %v428 = vld [vmem:[%s394 + $0x24] sm:$0xff]
                  %429 = vst [vmem:[%s395 + $0x10] sm:$0xff] %v428
                  %v430 = vld [vmem:[%s394 + $0x2c] sm:$0xff]
                  %431 = vst [vmem:[%s395 + $0x18] sm:$0xff] %v430
                  %v432 = vld [vmem:[%s394 + $0x34] sm:$0xff]
                  %433 = vst [vmem:[%s395 + $0x20] sm:$0xff] %v432
                  %v434 = vld [vmem:[%s394 + $0x3c] sm:$0xff]
                  %435 = vst [vmem:[%s395 + $0x28] sm:$0xff] %v434
                  %v436 = vld [vmem:[%s394 + $0x44] sm:$0xff]
                  %437 = vst [vmem:[%s395 + $0x30] sm:$0xff] %v436
                  %v438 = vld [vmem:[%s394 + $0x4c] sm:$0xff]
                  %439 = vst [vmem:[%s395 + $0x38] sm:$0xff] %v438
                  %v440 = vld [vmem:[%s394 + $0x54] sm:$0xff]
                  %441 = vst [vmem:[%s395 + $0x40] sm:$0xff] %v440
                  %v442 = vld [vmem:[%s394 + $0x5c] sm:$0xff]
                  %443 = vst [vmem:[%s395 + $0x48] sm:$0xff] %v442
                  %v444 = vld [vmem:[%s394 + $0x64] sm:$0xff]
                  %445 = vst [vmem:[%s395 + $0x50] sm:$0xff] %v444
                  %v446 = vld [vmem:[%s394 + $0x6c] sm:$0xff]
                  %447 = vst [vmem:[%s395 + $0x58] sm:$0xff] %v446
                  %v448 = vld [vmem:[%s394 + $0x74] sm:$0xff]
                  %449 = vst [vmem:[%s395 + $0x60] sm:$0xff] %v448
                  %v450 = vld [vmem:[%s394 + $0x7c] sm:$0xff]
                  %451 = vst [vmem:[%s395 + $0x68] sm:$0xff] %v450
                  %v452 = vld [vmem:[%s394 + $0x84] sm:$0xff]
                  %453 = vst [vmem:[%s395 + $0x70] sm:$0xff] %v452
                  %v454 = vld [vmem:[%s394 + $0x8c] sm:$0xff]
                  %455 = vst [vmem:[%s395 + $0x78] sm:$0xff] %v454
                  %v456 = vld [vmem:[%s394 + $0x94] sm:$0xff]
                  %457 = vst [vmem:[%s395 + $0x80] sm:$0xff] %v456
                  %v458 = vld [vmem:[%s394 + $0x9c] sm:$0xff]
                  %459 = vst [vmem:[%s395 + $0x88] sm:$0xff] %v458
                  %s460 = sadd.s32 1, %s393
                  %p461 = scmp.ge.s32.totalorder %s460, %s386
                  %s462 = scalar_select %p461, 0, %s460
                  %s463 = smul.u32 %s462, 128
                  %s464 = smul.u32 %s462, 128
                  %s465 = scalar_lea.vmem %s237, %s463
                  %s466 = scalar_lea.vmem %s229, %s464 [#allocation4]
                $region78: #{conv_lstm_forward.1} parent=72 // loop_footer
                  %s390 = sadd.s32 %s388, 1
                $region79: #{conv_lstm_forward.1} parent=72 // loop_footer_branch
                  %387 = sbr.rel target = $region75
                $region80: #{conv_lstm_forward.1} parent=72 // loop_exit
                  _
                %s467 = sshrl.u32 %s385, 4
                %s468 = sand.u32 %s385, 15
                %s469 = smul.u32 %s467, 16
                %s470 = smul.u32 8, %s469
                %s471 = scalar_lea.vmem %s237, %s470
                %s472 = smul.u32 8, %s469
                %s473 = scalar_lea.vmem %s229, %s472 [#allocation4]
                // While loop
                $region81: #{conv_lstm_forward.1} parent=72 // loop_pre_header
                  _
                $region82: #{conv_lstm_forward.1} parent=72 // loop_header
                  %s475 = sphi 0, %s477
                  %p476 = scmp.ge.s32.totalorder %s475, %s468
                  %s480 = sphi 0, %s489
                  %s481 = sphi %s471, %s492
                  %s482 = sphi %s473, %s493
                $region83: #{conv_lstm_forward.1} parent=72 // loop_header_branch
                  %479 = sbr.rel (%p476) target = $region87
                $region84: #{conv_lstm_forward.1} parent=72 // loop_body
                  %v483 = vld [vmem:[%s481] sm:$0xff]
                  %484 = vst [vmem:[%s482] sm:$0xff] %v483
                  %v485 = vld [vmem:[%s481 + $0x24] sm:$0xff]
                  %486 = vst [vmem:[%s482 + $0x10] sm:$0xff] %v485
                  %s487 = sadd.s32 1, %s480
                  %p488 = scmp.ge.s32.totalorder %s487, %s468
                  %s489 = scalar_select %p488, 0, %s487
                  %s490 = smul.u32 %s489, 8
                  %s491 = smul.u32 %s489, 8
                  %s492 = scalar_lea.vmem %s471, %s490
                  %s493 = scalar_lea.vmem %s473, %s491 [#allocation4]
                $region85: #{conv_lstm_forward.1} parent=72 // loop_footer
                  %s477 = sadd.s32 %s475, 1
                $region86: #{conv_lstm_forward.1} parent=72 // loop_footer_branch
                  %474 = sbr.rel target = $region82
                $region87: #{conv_lstm_forward.1} parent=72 // loop_exit
                  _
                %s494 = sshll.u32 1, %s380
                %s495 = ssub.s32 %s494, 1
                loop: start=0, step=1, limit=1
                $region88: #{conv_lstm_forward.1} parent=72 // loop_pre_header
                  _
                $region89: #{conv_lstm_forward.1} parent=72 // loop_header
                  %s497 = sphi 0, %s501
                  %p498 = scmp.ge.s32.totalorder %s497, 1
                  %s502 = sphi %s382, %s382
                  %s503 = sphi %s384, %s384
                $region90: #{conv_lstm_forward.1} parent=72 // loop_header_branch
                  %500 = sbr.rel (%p498) target = $region94
                $region91: #{conv_lstm_forward.1} parent=72 // loop_body
                  %v504 = vld [vmem:[%s502] sm:%s495]
                  %505 = vst [vmem:[%s503] sm:%s495] %v504
                  %v506 = vld [vmem:[%s502 + $0x24] sm:%s495]
                  %507 = vst [vmem:[%s503 + $0x10] sm:%s495] %v506
                $region92: #{conv_lstm_forward.1} parent=72 // loop_footer
                  %s501 = sadd.s32 1, %s497
                $region93: #{conv_lstm_forward.1} parent=72 // loop_footer_branch
                  %496 = sbr.rel target = $region89
                $region94: #{conv_lstm_forward.1} parent=72 // loop_exit
                  _
              $region73: #{conv_lstm_forward.1} parent=39 // pred_fallthru
                _
            $region40: #{conv_lstm_forward.1} parent=35 // pred_fallthru
              _
            // Predicated region
            $region41: #{conv_lstm_forward.1} parent=35 // pred_check
              %p246 = pneg %p242
            $region42: #{conv_lstm_forward.1} parent=35 // pred_check_branch
              %248 = sbr.rel (%p246) target = $region44
            $region43: #{conv_lstm_forward.1} parent=35 // pred_region
              %s249 = sshll.u32 1, %s238
              %s250 = ssub.s32 %s249, 1
              loop: start=0, step=1, limit=1
              $region45: #{conv_lstm_forward.1} parent=43 // loop_pre_header
                _
              $region46: #{conv_lstm_forward.1} parent=43 // loop_header
                %s252 = sphi 0, %s256
                %p253 = scmp.ge.s32.totalorder %s252, 1
                %s257 = sphi %s237, %s237
                %s258 = sphi %s229, %s229
              $region47: #{conv_lstm_forward.1} parent=43 // loop_header_branch
                %255 = sbr.rel (%p253) target = $region51
              $region48: #{conv_lstm_forward.1} parent=43 // loop_body
                %v259 = vld [vmem:[%s257] sm:%s250]
                %260 = vst [vmem:[%s258] sm:%s250] %v259
                %v261 = vld [vmem:[%s257 + $0x24] sm:%s250]
                %262 = vst [vmem:[%s258 + $0x10] sm:%s250] %v261
              $region49: #{conv_lstm_forward.1} parent=43 // loop_footer
                %s256 = sadd.s32 1, %s252
              $region50: #{conv_lstm_forward.1} parent=43 // loop_footer_branch
                %251 = sbr.rel target = $region46
              $region51: #{conv_lstm_forward.1} parent=43 // loop_exit
                _
            $region44: #{conv_lstm_forward.1} parent=35 // pred_fallthru
              _
          $region36: #{conv_lstm_forward.1} parent=31 // pred_fallthru
            _
          %508 = vnop
        $region32: #{conv_lstm_forward.1} parent=23 // pred_fallthru
          _
        // Predicated region
        $region95: #{conv_lstm_forward.1} parent=23 // pred_check
          %p509 = pneg %p131
        $region96: #{conv_lstm_forward.1} parent=23 // pred_check_branch
          %511 = sbr.rel (%p509) target = $region98
        $region97: #{conv_lstm_forward.1} parent=23 // pred_region
          %s512 = sand.u32 %s121, 1
          %s513 = sand.u32 %s121, 1
          %s514 = smul.addr %s513, 8
          %s515 = scalar_lea.vmem [#allocation5], %s514
          %s516 = sadd.s32 %s13, 1
          %s517 = smul.u32 %s516, 4
          %s518 = smul.addr %s517, 4
          %s519 = scalar_lea.vmem %s4, %s518
          // Predicated region
          $region99: #{conv_lstm_forward.1} parent=97 // pred_check
            _
          $region100: #{conv_lstm_forward.1} parent=97 // pred_check_branch
            %521 = sbr.rel (0) target = $region102
          $region101: #{conv_lstm_forward.1} parent=97 // pred_region
            // Predicated region
            $region103: #{conv_lstm_forward.1} parent=101 // pred_check
              _
            $region104: #{conv_lstm_forward.1} parent=101 // pred_check_branch
              %523 = sbr.rel target = $region106
            $region105: #{conv_lstm_forward.1} parent=101 // pred_region
              // Predicated region
              $region118: #{conv_lstm_forward.1} parent=105 // pred_check
                _
              $region119: #{conv_lstm_forward.1} parent=105 // pred_check_branch
                %541 = sbr.rel (0) target = $region121
              $region120: #{conv_lstm_forward.1} parent=105 // pred_region
                loop: start=0, step=1, limit=1
                $region122: #{conv_lstm_forward.1} parent=120 // loop_pre_header
                  _
                $region123: #{conv_lstm_forward.1} parent=120 // loop_header
                  %s543 = sphi 0, %s547
                  %p544 = scmp.ge.s32.totalorder %s543, 1
                  %s548 = sphi %s519, %s519
                  %s549 = sphi %s515, %s515
                $region124: #{conv_lstm_forward.1} parent=120 // loop_header_branch
                  %546 = sbr.rel (%p544) target = $region128
                $region125: #{conv_lstm_forward.1} parent=120 // loop_body
                  _
                $region126: #{conv_lstm_forward.1} parent=120 // loop_footer
                  %s547 = sadd.s32 1, %s543
                $region127: #{conv_lstm_forward.1} parent=120 // loop_footer_branch
                  %542 = sbr.rel target = $region123
                $region128: #{conv_lstm_forward.1} parent=120 // loop_exit
                  _
                %s551 = ssub.s32 16, 1
                loop: start=0, step=1, limit=1
                $region129: #{conv_lstm_forward.1} parent=120 // loop_pre_header
                  _
                $region130: #{conv_lstm_forward.1} parent=120 // loop_header
                  %s553 = sphi 0, %s557
                  %p554 = scmp.ge.s32.totalorder %s553, 1
                  %s558 = sphi %s519, %s519
                  %s559 = sphi %s515, %s515
                $region131: #{conv_lstm_forward.1} parent=120 // loop_header_branch
                  %556 = sbr.rel (%p554) target = $region135
                $region132: #{conv_lstm_forward.1} parent=120 // loop_body
                  %v560 = vld [vmem:[%s558] sm:%s551]
                  %561 = vst [vmem:[%s559] sm:%s551] %v560
                  %v562 = vld [vmem:[%s558 + $0x24] sm:%s551]
                  %563 = vst [vmem:[%s559 + $0x4] sm:%s551] %v562
                $region133: #{conv_lstm_forward.1} parent=120 // loop_footer
                  %s557 = sadd.s32 1, %s553
                $region134: #{conv_lstm_forward.1} parent=120 // loop_footer_branch
                  %552 = sbr.rel target = $region130
                $region135: #{conv_lstm_forward.1} parent=120 // loop_exit
                  _
              $region121: #{conv_lstm_forward.1} parent=105 // pred_fallthru
                _
            $region106: #{conv_lstm_forward.1} parent=101 // pred_fallthru
              _
            // Predicated region
            $region107: #{conv_lstm_forward.1} parent=101 // pred_check
              _
            $region108: #{conv_lstm_forward.1} parent=101 // pred_check_branch
              %525 = sbr.rel (0) target = $region110
            $region109: #{conv_lstm_forward.1} parent=101 // pred_region
              %s527 = ssub.s32 16, 1
              loop: start=0, step=1, limit=1
              $region111: #{conv_lstm_forward.1} parent=109 // loop_pre_header
                _
              $region112: #{conv_lstm_forward.1} parent=109 // loop_header
                %s529 = sphi 0, %s533
                %p530 = scmp.ge.s32.totalorder %s529, 1
                %s534 = sphi %s519, %s519
                %s535 = sphi %s515, %s515
              $region113: #{conv_lstm_forward.1} parent=109 // loop_header_branch
                %532 = sbr.rel (%p530) target = $region117
              $region114: #{conv_lstm_forward.1} parent=109 // loop_body
                %v536 = vld [vmem:[%s534] sm:%s527]
                %537 = vst [vmem:[%s535] sm:%s527] %v536
                %v538 = vld [vmem:[%s534 + $0x24] sm:%s527]
                %539 = vst [vmem:[%s535 + $0x4] sm:%s527] %v538
              $region115: #{conv_lstm_forward.1} parent=109 // loop_footer
                %s533 = sadd.s32 1, %s529
              $region116: #{conv_lstm_forward.1} parent=109 // loop_footer_branch
                %528 = sbr.rel target = $region112
              $region117: #{conv_lstm_forward.1} parent=109 // loop_exit
                _
            $region110: #{conv_lstm_forward.1} parent=101 // pred_fallthru
              _
          $region102: #{conv_lstm_forward.1} parent=97 // pred_fallthru
            _
          %564 = vnop
        $region98: #{conv_lstm_forward.1} parent=23 // pred_fallthru
          _
      $region24: #{conv_lstm_forward.1} parent=5 // pred_fallthru
        _
      %p565 = scmp.le.s32.totalorder 1, %s13
      %p566 = scmp.lt.s32.totalorder %s13, 3
      %p567 = pnand %p565, %p566
      %p568 = pneg %p567
      // Predicated region
      $region136: #{conv_lstm_forward.1} parent=5 // pred_check
        _
      $region137: #{conv_lstm_forward.1} parent=5 // pred_check_branch
        %570 = sbr.rel (%p567) target = $region139
      $region138: #{conv_lstm_forward.1} parent=5 // pred_region
        %s571 = ssub.s32 %s13, 1
        %s572 = sand.u32 %s94, 1
        %s573 = sand.u32 %s94, 1
        %s574 = smul.addr %s573, 32
        %s575 = scalar_lea.vmem [#allocation4], %s574
        // Predicated region
        $region140: #{conv_lstm_forward.1} parent=138 // pred_check
          %p576 = pneg %p107
        $region141: #{conv_lstm_forward.1} parent=138 // pred_check_branch
          %578 = sbr.rel (%p576) target = $region143
        $region142: #{conv_lstm_forward.1} parent=138 // pred_region
          _
        $region143: #{conv_lstm_forward.1} parent=138 // pred_fallthru
          _
        %s579 = sand.u32 %s124, 1
        %s580 = sand.u32 %s124, 1
        %s581 = smul.addr %s580, 8
        %s582 = scalar_lea.vmem [#allocation5], %s581
        // Predicated region
        $region144: #{conv_lstm_forward.1} parent=138 // pred_check
          %p583 = pneg %p137
        $region145: #{conv_lstm_forward.1} parent=138 // pred_check_branch
          %585 = sbr.rel (%p583) target = $region147
        $region146: #{conv_lstm_forward.1} parent=138 // pred_region
          _
        $region147: #{conv_lstm_forward.1} parent=138 // pred_fallthru
          _
        %s586 = smul.u32 4, %s18
        %p587 = scmp.lt.s32.totalorder %s586, 7
        %s588 = scalar_select %p587, %s586, 7
        %s589 = smul.addr %s588, 8
        %s590 = scalar_lea.vmem %s0, %s589
        %p591 = pneg %p39
        %p592 = pneg %p36
        %p593 = pneg %p60
        %p594 = pneg %p57
        %p595 = pneg %p81
        %p596 = pneg %p78
        %s597 = sand.u32 %s94, 1
        %s598 = sand.u32 %s94, 1
        %s599 = smul.addr %s598, 32
        %s600 = scalar_lea.vmem [#allocation4], %s599
        %p601 = pneg %p107
        %p602 = pneg %p104
        %s603 = sand.u32 %s124, 1
        %s604 = sand.u32 %s124, 1
        %s605 = smul.addr %s604, 8
        %s606 = scalar_lea.vmem [#allocation5], %s605
        %p607 = pneg %p137
        %p608 = pneg %p134
        %p609 = pneg %p163
        %p610 = pneg %p160
        %s611 = smul.u32 4, %s18
        %p612 = scmp.lt.s32.totalorder %s611, 7
        %s613 = scalar_select %p612, %s611, 7
        %s614 = smul.addr %s613, 8
        %s615 = scalar_lea.vmem %s5, %s614
        %p616 = pneg %p189
        %p617 = pneg %p186
        %s618 = smul.u32 4, %s18
        %p619 = scmp.lt.s32.totalorder %s618, 7
        %s620 = scalar_select %p619, %s618, 7
        %s621 = smul.addr %s620, 8
        %s622 = scalar_lea.vmem %s6, %s621
        %s623 = smul.u32 4, %s18
        %p624 = scmp.lt.s32.totalorder %s623, 7
        %s625 = scalar_select %p624, %s623, 7
        %s626 = smul.addr %s625, 8
        %s627 = scalar_lea.vmem %s0, %s626
        %s628 = smul.u32 4, %s18
        %s629 = smul.u32 4, %s18
        %s630 = ssub.s32 9, %s629
        %p631 = scmp.lt.s32.totalorder %s630, 4
        %s632 = scalar_select %p631, %s630, 4
        %s633 = smul.u32 8, %s632
        %s634 = sadd.s32 %s18, 1
        %s635 = smul.u32 %s634, 4
        %s636 = smul.u32 4, %s18
        %p637 = scmp.lt.s32.totalorder %s636, 7
        %s638 = scalar_select %p637, %s636, 7
        %s639 = smul.addr %s638, 8
        %s640 = scalar_lea.vmem %s5, %s639
        %s641 = smul.u32 4, %s18
        %s642 = smul.u32 4, %s18
        %p643 = scmp.lt.s32.totalorder %s642, 7
        %s644 = scalar_select %p643, %s642, 7
        %s645 = smul.addr %s644, 8
        %s646 = scalar_lea.vmem %s6, %s645
        %s647 = smul.u32 4, %s18
        %v649 = vld [vmem:[%s575] sm:$0xff]
        %v650 = vld [vmem:[%s575 + $0x8] sm:$0xff]
        %v651 = vld [vmem:[%s575 + $0x10] sm:$0xff]
        %v652 = vld [vmem:[%s575 + $0x18] sm:$0xff]
        %653 = vst [vmem:[#allocation2] sm:$0xff] %v649
        %654 = vst [vmem:[#allocation2 + $0x8] sm:$0xff] %v650
        %655 = vst [vmem:[#allocation2 + $0x14] sm:$0xff] %v651
        %656 = vst [vmem:[#allocation2 + $0x1c] sm:$0xff] %v652
        %v657 = vld [vmem:[%s582] sm:$0xf]
        %v658 = vld [vmem:[%s582 + $0x4] sm:$0xf]
        %659 = vst [vmem:[#allocation2 + $0x10] sm:$0xf] %v657
        %660 = vst [vmem:[#allocation2 + $0x24] sm:$0xf] %v658
        %v661 = vld [vmem:[#allocation2] sm:$0xff]
        %v662 = vld [vmem:[#allocation2 + $0x8] sm:$0xff]
        %v663 = vld [vmem:[#allocation2 + $0x10] sm:$0xf]
        %v664 = vld [vmem:[#allocation2 + $0x14] sm:$0xff]
        %v665 = vld [vmem:[#allocation2 + $0x1c] sm:$0xff]
        %v666 = vld [vmem:[#allocation2 + $0x24] sm:$0xf]
        %667 = vst [vmem:[#allocation3] sm:$0xff] %v661
        %668 = vst [vmem:[#allocation3 + $0x8] sm:$0xff] %v662
        %669 = vst [vmem:[#allocation3 + $0x10] sm:$0xff] %v664
        %670 = vst [vmem:[#allocation3 + $0x18] sm:$0xff] %v665
        %677 = vrot.lane.b32.xlu0 %v661, 127
        %v678 = vpop.permute.xlu0 %677
        %679 = vrot.lane.b32.xlu0 %v662, 127
        %v680 = vpop.permute.xlu0 %679
        %681 = vrot.lane.b32.xlu0 %v663, 127
        %v682 = vpop.permute.xlu0 %681
        %683 = vrot.lane.b32.xlu0 %v664, 127
        %v684 = vpop.permute.xlu0 %683
        %685 = vrot.lane.b32.xlu0 %v665, 127
        %v686 = vpop.permute.xlu0 %685
        %687 = vrot.lane.b32.xlu0 %v666, 127
        %v688 = vpop.permute.xlu0 %687
        %v689 = vrot.slane %v678, 4
        %v690 = vrot.slane %v680, 4
        %v691 = vrot.slane %v682, 4
        %v692 = vrot.slane %v684, 4
        %v693 = vrot.slane %v686, 4
        %v694 = vrot.slane %v688, 4
        %vm695 = vcmask 1043456
        %v696 = vsel %vm695, %v689, %v690
        %vm697 = vcmask 1039360
        %v698 = vsel %vm697, %v678, %v696
        %v699 = vsel %vm695, %v690, %v691
        %v700 = vsel %vm697, %v680, %v699
        %v701 = vsel %vm695, %v692, %v693
        %v702 = vsel %vm697, %v684, %v701
        %v703 = vsel %vm695, %v693, %v694
        %v704 = vsel %vm697, %v686, %v703
        %709 = vst [vmem:[#allocation3 + $0x20] sm:$0xff] %v698
        %710 = vst [vmem:[#allocation3 + $0x28] sm:$0xff] %v700
        %711 = vst [vmem:[#allocation3 + $0x30] sm:$0xff] %v702
        %712 = vst [vmem:[#allocation3 + $0x38] sm:$0xff] %v704
        %713 = vrot.lane.b32.xlu0 %v661, 126
        %v714 = vpop.permute.xlu0 %713
        %715 = vrot.lane.b32.xlu0 %v662, 126
        %v716 = vpop.permute.xlu0 %715
        %717 = vrot.lane.b32.xlu0 %v663, 126
        %v718 = vpop.permute.xlu0 %717
        %719 = vrot.lane.b32.xlu0 %v664, 126
        %v720 = vpop.permute.xlu0 %719
        %721 = vrot.lane.b32.xlu0 %v665, 126
        %v722 = vpop.permute.xlu0 %721
        %723 = vrot.lane.b32.xlu0 %v666, 126
        %v724 = vpop.permute.xlu0 %723
        %v725 = vrot.slane %v714, 4
        %v726 = vrot.slane %v716, 4
        %v727 = vrot.slane %v718, 4
        %v728 = vrot.slane %v720, 4
        %v729 = vrot.slane %v722, 4
        %v730 = vrot.slane %v724, 4
        %v731 = vsel %vm695, %v725, %v726
        %vm732 = vcmask 1031168
        %v733 = vsel %vm732, %v714, %v731
        %v734 = vsel %vm695, %v726, %v727
        %v735 = vsel %vm732, %v716, %v734
        %v736 = vsel %vm695, %v728, %v729
        %v737 = vsel %vm732, %v720, %v736
        %v738 = vsel %vm695, %v729, %v730
        %v739 = vsel %vm732, %v722, %v738
        %744 = vst [vmem:[#allocation3 + $0x40] sm:$0xff] %v733
        %745 = vst [vmem:[#allocation3 + $0x48] sm:$0xff] %v735
        %746 = vst [vmem:[#allocation3 + $0x50] sm:$0xff] %v737
        %747 = vst [vmem:[#allocation3 + $0x58] sm:$0xff] %v739
        %748 = vrot.lane.b32.xlu0 %v661, 110
        %v749 = vpop.permute.xlu0 %748
        %750 = vrot.lane.b32.xlu0 %v662, 110
        %v751 = vpop.permute.xlu0 %750
        %752 = vrot.lane.b32.xlu0 %v663, 110
        %v753 = vpop.permute.xlu0 %752
        %754 = vrot.lane.b32.xlu0 %v664, 110
        %v755 = vpop.permute.xlu0 %754
        %756 = vrot.lane.b32.xlu0 %v665, 110
        %v757 = vpop.permute.xlu0 %756
        %758 = vrot.lane.b32.xlu0 %v666, 110
        %v759 = vpop.permute.xlu0 %758
        %v760 = vrot.slane %v749, 4
        %v761 = vrot.slane %v751, 4
        %v762 = vrot.slane %v753, 4
        %v763 = vrot.slane %v755, 4
        %v764 = vrot.slane %v757, 4
        %v765 = vrot.slane %v759, 4
        %v766 = vsel %vm695, %v760, %v761
        %vm767 = vcmask 900096
        %v768 = vsel %vm767, %v749, %v766
        %v769 = vsel %vm695, %v761, %v762
        %v770 = vsel %vm767, %v751, %v769
        %v771 = vsel %vm695, %v763, %v764
        %v772 = vsel %vm767, %v755, %v771
        %v773 = vsel %vm695, %v764, %v765
        %v774 = vsel %vm767, %v757, %v773
        %779 = vst [vmem:[#allocation3 + $0x60] sm:$0xff] %v768
        %780 = vst [vmem:[#allocation3 + $0x68] sm:$0xff] %v770
        %781 = vst [vmem:[#allocation3 + $0x70] sm:$0xff] %v772
        %782 = vst [vmem:[#allocation3 + $0x78] sm:$0xff] %v774
        %783 = vrot.lane.b32.xlu0 %v661, 109
        %v784 = vpop.permute.xlu0 %783
        %785 = vrot.lane.b32.xlu0 %v662, 109
        %v786 = vpop.permute.xlu0 %785
        %787 = vrot.lane.b32.xlu0 %v663, 109
        %v788 = vpop.permute.xlu0 %787
        %789 = vrot.lane.b32.xlu0 %v664, 109
        %v790 = vpop.permute.xlu0 %789
        %791 = vrot.lane.b32.xlu0 %v665, 109
        %v792 = vpop.permute.xlu0 %791
        %793 = vrot.lane.b32.xlu0 %v666, 109
        %v794 = vpop.permute.xlu0 %793
        %v795 = vrot.slane %v784, 4
        %v796 = vrot.slane %v786, 4
        %v797 = vrot.slane %v788, 4
        %v798 = vrot.slane %v790, 4
        %v799 = vrot.slane %v792, 4
        %v800 = vrot.slane %v794, 4
        %v801 = vsel %vm695, %v795, %v796
        %vm802 = vcmask 891904
        %v803 = vsel %vm802, %v784, %v801
        %v804 = vsel %vm695, %v796, %v797
        %v805 = vsel %vm802, %v786, %v804
        %v806 = vsel %vm695, %v798, %v799
        %v807 = vsel %vm802, %v790, %v806
        %v808 = vsel %vm695, %v799, %v800
        %v809 = vsel %vm802, %v792, %v808
        %814 = vst [vmem:[#allocation3 + $0x80] sm:$0xff] %v803
        %815 = vst [vmem:[#allocation3 + $0x88] sm:$0xff] %v805
        %816 = vst [vmem:[#allocation3 + $0x90] sm:$0xff] %v807
        %817 = vst [vmem:[#allocation3 + $0x98] sm:$0xff] %v809
        %818 = vrot.lane.b32.xlu0 %v661, 108
        %v819 = vpop.permute.xlu0 %818
        %820 = vrot.lane.b32.xlu0 %v662, 108
        %v821 = vpop.permute.xlu0 %820
        %822 = vrot.lane.b32.xlu0 %v663, 108
        %v823 = vpop.permute.xlu0 %822
        %824 = vrot.lane.b32.xlu0 %v664, 108
        %v825 = vpop.permute.xlu0 %824
        %826 = vrot.lane.b32.xlu0 %v665, 108
        %v827 = vpop.permute.xlu0 %826
        %828 = vrot.lane.b32.xlu0 %v666, 108
        %v829 = vpop.permute.xlu0 %828
        %v830 = vrot.slane %v819, 4
        %v831 = vrot.slane %v821, 4
        %v832 = vrot.slane %v823, 4
        %v833 = vrot.slane %v825, 4
        %v834 = vrot.slane %v827, 4
        %v835 = vrot.slane %v829, 4
        %v836 = vsel %vm695, %v830, %v831
        %vm837 = vcmask 883712
        %v838 = vsel %vm837, %v819, %v836
        %v839 = vsel %vm695, %v831, %v832
        %v840 = vsel %vm837, %v821, %v839
        %v841 = vsel %vm695, %v833, %v834
        %v842 = vsel %vm837, %v825, %v841
        %v843 = vsel %vm695, %v834, %v835
        %v844 = vsel %vm837, %v827, %v843
        %849 = vst [vmem:[#allocation3 + $0xa0] sm:$0xff] %v838
        %850 = vst [vmem:[#allocation3 + $0xa8] sm:$0xff] %v840
        %851 = vst [vmem:[#allocation3 + $0xb0] sm:$0xff] %v842
        %852 = vst [vmem:[#allocation3 + $0xb8] sm:$0xff] %v844
        %853 = vrot.lane.b32.xlu0 %v661, 92
        %v854 = vpop.permute.xlu0 %853
        %855 = vrot.lane.b32.xlu0 %v662, 92
        %v856 = vpop.permute.xlu0 %855
        %857 = vrot.lane.b32.xlu0 %v663, 92
        %v858 = vpop.permute.xlu0 %857
        %859 = vrot.lane.b32.xlu0 %v664, 92
        %v860 = vpop.permute.xlu0 %859
        %861 = vrot.lane.b32.xlu0 %v665, 92
        %v862 = vpop.permute.xlu0 %861
        %863 = vrot.lane.b32.xlu0 %v666, 92
        %v864 = vpop.permute.xlu0 %863
        %v865 = vrot.slane %v854, 4
        %v866 = vrot.slane %v856, 4
        %v867 = vrot.slane %v858, 4
        %v868 = vrot.slane %v860, 4
        %v869 = vrot.slane %v862, 4
        %v870 = vrot.slane %v864, 4
        %v871 = vsel %vm695, %v865, %v866
        %vm872 = vcmask 752640
        %v873 = vsel %vm872, %v854, %v871
        %v874 = vsel %vm695, %v866, %v867
        %v875 = vsel %vm872, %v856, %v874
        %v876 = vsel %vm695, %v868, %v869
        %v877 = vsel %vm872, %v860, %v876
        %v878 = vsel %vm695, %v869, %v870
        %v879 = vsel %vm872, %v862, %v878
        %884 = vst [vmem:[#allocation3 + $0xc0] sm:$0xff] %v873
        %885 = vst [vmem:[#allocation3 + $0xc8] sm:$0xff] %v875
        %886 = vst [vmem:[#allocation3 + $0xd0] sm:$0xff] %v877
        %887 = vst [vmem:[#allocation3 + $0xd8] sm:$0xff] %v879
        %888 = vrot.lane.b32.xlu0 %v661, 91
        %v889 = vpop.permute.xlu0 %888
        %890 = vrot.lane.b32.xlu0 %v662, 91
        %v891 = vpop.permute.xlu0 %890
        %892 = vrot.lane.b32.xlu0 %v663, 91
        %v893 = vpop.permute.xlu0 %892
        %894 = vrot.lane.b32.xlu0 %v664, 91
        %v895 = vpop.permute.xlu0 %894
        %896 = vrot.lane.b32.xlu0 %v665, 91
        %v897 = vpop.permute.xlu0 %896
        %898 = vrot.lane.b32.xlu0 %v666, 91
        %v899 = vpop.permute.xlu0 %898
        %v900 = vrot.slane %v889, 4
        %v901 = vrot.slane %v891, 4
        %v902 = vrot.slane %v893, 4
        %v903 = vrot.slane %v895, 4
        %v904 = vrot.slane %v897, 4
        %v905 = vrot.slane %v899, 4
        %v906 = vsel %vm695, %v900, %v901
        %vm907 = vcmask 744448
        %v908 = vsel %vm907, %v889, %v906
        %v909 = vsel %vm695, %v901, %v902
        %v910 = vsel %vm907, %v891, %v909
        %v911 = vsel %vm695, %v903, %v904
        %v912 = vsel %vm907, %v895, %v911
        %v913 = vsel %vm695, %v904, %v905
        %v914 = vsel %vm907, %v897, %v913
        %919 = vst [vmem:[#allocation3 + $0xe0] sm:$0xff] %v908
        %920 = vst [vmem:[#allocation3 + $0xe8] sm:$0xff] %v910
        %921 = vst [vmem:[#allocation3 + $0xf0] sm:$0xff] %v912
        %922 = vst [vmem:[#allocation3 + $0xf8] sm:$0xff] %v914
        %923 = vrot.lane.b32.xlu0 %v661, 90
        %v924 = vpop.permute.xlu0 %923
        %925 = vrot.lane.b32.xlu0 %v662, 90
        %v926 = vpop.permute.xlu0 %925
        %927 = vrot.lane.b32.xlu0 %v663, 90
        %v928 = vpop.permute.xlu0 %927
        %929 = vrot.lane.b32.xlu0 %v664, 90
        %v930 = vpop.permute.xlu0 %929
        %931 = vrot.lane.b32.xlu0 %v665, 90
        %v932 = vpop.permute.xlu0 %931
        %933 = vrot.lane.b32.xlu0 %v666, 90
        %v934 = vpop.permute.xlu0 %933
        %v935 = vrot.slane %v924, 4
        %v936 = vrot.slane %v926, 4
        %v937 = vrot.slane %v928, 4
        %v938 = vrot.slane %v930, 4
        %v939 = vrot.slane %v932, 4
        %v940 = vrot.slane %v934, 4
        %v941 = vsel %vm695, %v935, %v936
        %vm942 = vcmask 736256
        %v943 = vsel %vm942, %v924, %v941
        %v944 = vsel %vm695, %v936, %v937
        %v945 = vsel %vm942, %v926, %v944
        %v946 = vsel %vm695, %v938, %v939
        %v947 = vsel %vm942, %v930, %v946
        %v948 = vsel %vm695, %v939, %v940
        %v949 = vsel %vm942, %v932, %v948
        %954 = vst [vmem:[#allocation3 + $0x100] sm:$0xff] %v943
        %955 = vst [vmem:[#allocation3 + $0x108] sm:$0xff] %v945
        %956 = vst [vmem:[#allocation3 + $0x110] sm:$0xff] %v947
        %957 = vst [vmem:[#allocation3 + $0x118] sm:$0xff] %v949
        %v958 = vld [vmem:[%s1] sm:$0xff]
        %v959 = vld [vmem:[%s1 + $0x8] sm:$0xff]
        %v960 = vld [vmem:[%s1 + $0x10] sm:$0xff]
        %v961 = vld [vmem:[%s1 + $0x18] sm:$0xff]
        %v962 = vld [vmem:[#allocation3] sm:$0xff]
        %v963 = vld [vmem:[#allocation3 + $0x8] sm:$0xff]
        %v964 = vld [vmem:[#allocation3 + $0x10] sm:$0xff]
        %v965 = vld [vmem:[#allocation3 + $0x18] sm:$0xff]
        %v966 = vld [vmem:[#allocation3 + $0x20] sm:$0xff]
        %v967 = vld [vmem:[#allocation3 + $0x28] sm:$0xff]
        %v968 = vld [vmem:[#allocation3 + $0x30] sm:$0xff]
        %v969 = vld [vmem:[#allocation3 + $0x38] sm:$0xff]
        %v970 = vld [vmem:[#allocation3 + $0x40] sm:$0xff]
        %v971 = vld [vmem:[#allocation3 + $0x48] sm:$0xff]
        %v972 = vld [vmem:[#allocation3 + $0x50] sm:$0xff]
        %v973 = vld [vmem:[#allocation3 + $0x58] sm:$0xff]
        %v974 = vld [vmem:[#allocation3 + $0x60] sm:$0xff]
        %v975 = vld [vmem:[#allocation3 + $0x68] sm:$0xff]
        %v976 = vld [vmem:[#allocation3 + $0x70] sm:$0xff]
        %v977 = vld [vmem:[#allocation3 + $0x78] sm:$0xff]
        %v978 = vld [vmem:[#allocation3 + $0x80] sm:$0xff]
        %v979 = vld [vmem:[#allocation3 + $0x88] sm:$0xff]
        %v980 = vld [vmem:[#allocation3 + $0x90] sm:$0xff]
        %v981 = vld [vmem:[#allocation3 + $0x98] sm:$0xff]
        %v982 = vld [vmem:[#allocation3 + $0xa0] sm:$0xff]
        %v983 = vld [vmem:[#allocation3 + $0xa8] sm:$0xff]
        %v984 = vld [vmem:[#allocation3 + $0xb0] sm:$0xff]
        %v985 = vld [vmem:[#allocation3 + $0xb8] sm:$0xff]
        %v986 = vld [vmem:[#allocation3 + $0xc0] sm:$0xff]
        %v987 = vld [vmem:[#allocation3 + $0xc8] sm:$0xff]
        %v988 = vld [vmem:[#allocation3 + $0xd0] sm:$0xff]
        %v989 = vld [vmem:[#allocation3 + $0xd8] sm:$0xff]
        %v990 = vld [vmem:[#allocation3 + $0xe0] sm:$0xff]
        %v991 = vld [vmem:[#allocation3 + $0xe8] sm:$0xff]
        %v992 = vld [vmem:[#allocation3 + $0xf0] sm:$0xff]
        %v993 = vld [vmem:[#allocation3 + $0xf8] sm:$0xff]
        %v994 = vld [vmem:[#allocation3 + $0x100] sm:$0xff]
        %v995 = vld [vmem:[#allocation3 + $0x108] sm:$0xff]
        %v996 = vld [vmem:[#allocation3 + $0x110] sm:$0xff]
        %v997 = vld [vmem:[#allocation3 + $0x118] sm:$0xff]
        %v998 = vld [vmem:[%s2] sm:$0xff]
        %v999 = vld [vmem:[%s2 + $0x8] sm:$0xff]
        %v1000 = vld [vmem:[%s2 + $0x10] sm:$0xff]
        %v1001 = vld [vmem:[%s2 + $0x18] sm:$0xff]
        %1003 = vset.pattern.permute.xlu0 0
        %1004 = vperm.xlu0 %1003, %v998
        %v1005 = vpop.permute.xlu0 %1004
        %1008 = vset.pattern.permute.xlu0 0
        %1009 = vperm.xlu0 %1008, %v999
        %v1010 = vpop.permute.xlu0 %1009
        %1013 = vset.pattern.permute.xlu0 0
        %1014 = vperm.xlu0 %1013, %v1000
        %v1015 = vpop.permute.xlu0 %1014
        %1018 = vset.pattern.permute.xlu0 0
        %1019 = vperm.xlu0 %1018, %v1001
        %v1020 = vpop.permute.xlu0 %1019
        %v1026 = vunpack.c.l.b16 %v958
        %v1027 = vunpack.c.h.b16 %v958
        %v1028 = vunpack.c.l.b16 %v959
        %v1029 = vunpack.c.h.b16 %v959
        %v1030 = vunpack.c.l.b16 %v960
        %v1031 = vunpack.c.h.b16 %v960
        %v1032 = vunpack.c.l.b16 %v961
        %v1033 = vunpack.c.h.b16 %v961
        %v1034 = vpack.c.b16 %v1028, %v1026
        %v1035 = vpack.c.b16 %v1029, %v1027
        %v1036 = vpack.c.b16 %v1032, %v1030
        %v1037 = vpack.c.b16 %v1033, %v1031
        %v1076 = vunpack.c.l.b16 %v962
        %v1077 = vunpack.c.h.b16 %v962
        %v1078 = vunpack.c.l.b16 %v963
        %v1079 = vunpack.c.h.b16 %v963
        %v1080 = vunpack.c.l.b16 %v964
        %v1081 = vunpack.c.h.b16 %v964
        %v1082 = vunpack.c.l.b16 %v965
        %v1083 = vunpack.c.h.b16 %v965
        %v1084 = vunpack.c.l.b16 %v966
        %v1085 = vunpack.c.h.b16 %v966
        %v1086 = vunpack.c.l.b16 %v967
        %v1087 = vunpack.c.h.b16 %v967
        %v1088 = vunpack.c.l.b16 %v968
        %v1089 = vunpack.c.h.b16 %v968
        %v1090 = vunpack.c.l.b16 %v969
        %v1091 = vunpack.c.h.b16 %v969
        %v1092 = vunpack.c.l.b16 %v970
        %v1093 = vunpack.c.h.b16 %v970
        %v1094 = vunpack.c.l.b16 %v971
        %v1095 = vunpack.c.h.b16 %v971
        %v1096 = vunpack.c.l.b16 %v972
        %v1097 = vunpack.c.h.b16 %v972
        %v1098 = vunpack.c.l.b16 %v973
        %v1099 = vunpack.c.h.b16 %v973
        %v1100 = vunpack.c.l.b16 %v974
        %v1101 = vunpack.c.h.b16 %v974
        %v1102 = vunpack.c.l.b16 %v975
        %v1103 = vunpack.c.h.b16 %v975
        %v1104 = vunpack.c.l.b16 %v976
        %v1105 = vunpack.c.h.b16 %v976
        %v1106 = vunpack.c.l.b16 %v977
        %v1107 = vunpack.c.h.b16 %v977
        %v1108 = vunpack.c.l.b16 %v978
        %v1109 = vunpack.c.h.b16 %v978
        %v1110 = vunpack.c.l.b16 %v979
        %v1111 = vunpack.c.h.b16 %v979
        %v1112 = vunpack.c.l.b16 %v980
        %v1113 = vunpack.c.h.b16 %v980
        %v1114 = vunpack.c.l.b16 %v981
        %v1115 = vunpack.c.h.b16 %v981
        %v1116 = vunpack.c.l.b16 %v982
        %v1117 = vunpack.c.h.b16 %v982
        %v1118 = vunpack.c.l.b16 %v983
        %v1119 = vunpack.c.h.b16 %v983
        %v1120 = vunpack.c.l.b16 %v984
        %v1121 = vunpack.c.h.b16 %v984
        %v1122 = vunpack.c.l.b16 %v985
        %v1123 = vunpack.c.h.b16 %v985
        %v1124 = vunpack.c.l.b16 %v986
        %v1125 = vunpack.c.h.b16 %v986
        %v1126 = vunpack.c.l.b16 %v987
        %v1127 = vunpack.c.h.b16 %v987
        %v1128 = vunpack.c.l.b16 %v988
        %v1129 = vunpack.c.h.b16 %v988
        %v1130 = vunpack.c.l.b16 %v989
        %v1131 = vunpack.c.h.b16 %v989
        %v1132 = vunpack.c.l.b16 %v990
        %v1133 = vunpack.c.h.b16 %v990
        %v1134 = vunpack.c.l.b16 %v991
        %v1135 = vunpack.c.h.b16 %v991
        %v1136 = vunpack.c.l.b16 %v992
        %v1137 = vunpack.c.h.b16 %v992
        %v1138 = vunpack.c.l.b16 %v993
        %v1139 = vunpack.c.h.b16 %v993
        %v1140 = vunpack.c.l.b16 %v994
        %v1141 = vunpack.c.h.b16 %v994
        %v1142 = vunpack.c.l.b16 %v995
        %v1143 = vunpack.c.h.b16 %v995
        %v1144 = vunpack.c.l.b16 %v996
        %v1145 = vunpack.c.h.b16 %v996
        %v1146 = vunpack.c.l.b16 %v997
        %v1147 = vunpack.c.h.b16 %v997
        %v1148 = vpack.c.b16 %v1080, %v1076
        %v1149 = vpack.c.b16 %v1081, %v1077
        %v1150 = vpack.c.b16 %v1082, %v1078
        %v1151 = vpack.c.b16 %v1083, %v1079
        %v1152 = vpack.c.b16 %v1088, %v1084
        %v1153 = vpack.c.b16 %v1089, %v1085
        %v1154 = vpack.c.b16 %v1090, %v1086
        %v1155 = vpack.c.b16 %v1091, %v1087
        %v1156 = vpack.c.b16 %v1096, %v1092
        %v1157 = vpack.c.b16 %v1097, %v1093
        %v1158 = vpack.c.b16 %v1098, %v1094
        %v1159 = vpack.c.b16 %v1099, %v1095
        %v1160 = vpack.c.b16 %v1104, %v1100
        %v1161 = vpack.c.b16 %v1105, %v1101
        %v1162 = vpack.c.b16 %v1106, %v1102
        %v1163 = vpack.c.b16 %v1107, %v1103
        %v1164 = vpack.c.b16 %v1112, %v1108
        %v1165 = vpack.c.b16 %v1113, %v1109
        %v1166 = vpack.c.b16 %v1114, %v1110
        %v1167 = vpack.c.b16 %v1115, %v1111
        %v1168 = vpack.c.b16 %v1120, %v1116
        %v1169 = vpack.c.b16 %v1121, %v1117
        %v1170 = vpack.c.b16 %v1122, %v1118
        %v1171 = vpack.c.b16 %v1123, %v1119
        %v1172 = vpack.c.b16 %v1128, %v1124
        %v1173 = vpack.c.b16 %v1129, %v1125
        %v1174 = vpack.c.b16 %v1130, %v1126
        %v1175 = vpack.c.b16 %v1131, %v1127
        %v1176 = vpack.c.b16 %v1136, %v1132
        %v1177 = vpack.c.b16 %v1137, %v1133
        %v1178 = vpack.c.b16 %v1138, %v1134
        %v1179 = vpack.c.b16 %v1139, %v1135
        %v1180 = vpack.c.b16 %v1144, %v1140
        %v1181 = vpack.c.b16 %v1145, %v1141
        %v1182 = vpack.c.b16 %v1146, %v1142
        %v1183 = vpack.c.b16 %v1147, %v1143
        %vm1220 = vcmask 130048
        %v1222 = vsel %vm1220, %v1035, 0
        %v1225 = vsel %vm1220, %v1037, 0
        %1227 = vmatpush.bf16.msra.mxu0 %v1176
        %1228 = vmatpush.bf16.msra.mxu0 %v1172
        %1229 = vmatpush.bf16.msra.mxu0 %v1168
        %1230 = vmatpush.bf16.msra.mxu0 %v1164
        %1231 = vmatpush.bf16.msra.mxu0 %v1160
        %1232 = vmatpush.bf16.msra.mxu0 %v1156
        %1233 = vmatpush.bf16.msra.mxu0 %v1152
        %1234 = vmatpush.bf16.msra.mxu0 %v1148
        %1235 = vmatmul.bf16.gmra.mxu0 %v1034
        %v1236 = vpop.f32.mrf.mxu0
        %v1237 = vadd.f32 %v1005, %v1236
        %v1238 = vpop.f32.mrf.mxu0
        %v1239 = vadd.f32 %v1010, %v1238
        %1240 = vmatmul.bf16.gmra.mxu0 %v1036
        %v1241 = vpop.f32.mrf.mxu0
        %v1242 = vadd.f32 %v1015, %v1241
        %v1243 = vpop.f32.mrf.mxu0
        %v1244 = vadd.f32 %v1020, %v1243
        %1245 = vdwg.mxu0
        %1246 = vmatpush.bf16.msra.mxu0 0
        %1247 = vmatpush.bf16.msra.mxu0 0
        %1248 = vmatpush.bf16.msra.mxu0 0
        %1249 = vmatpush.bf16.msra.mxu0 0
        %1250 = vmatpush.bf16.msra.mxu0 0
        %1251 = vmatpush.bf16.msra.mxu0 0
        %1252 = vmatpush.bf16.msra.mxu0 0
        %1253 = vmatpush.bf16.msra.mxu0 %v1180
        %1254 = vmatmul.bf16.gmra.mxu0 %v1222
        %v1255 = vpop.f32.mrf.mxu0
        %v1256 = vadd.f32 %v1237, %v1255
        %v1257 = vpop.f32.mrf.mxu0
        %v1258 = vadd.f32 %v1239, %v1257
        %1259 = vmatmul.bf16.gmra.mxu0 %v1225
        %v1260 = vpop.f32.mrf.mxu0
        %v1261 = vadd.f32 %v1242, %v1260
        %v1262 = vpop.f32.mrf.mxu0
        %v1263 = vadd.f32 %v1244, %v1262
        %1264 = vdwg.mxu0
        %1265 = vmatpush.bf16.msra.mxu0 %v1177
        %1266 = vmatpush.bf16.msra.mxu0 %v1173
        %1267 = vmatpush.bf16.msra.mxu0 %v1169
        %1268 = vmatpush.bf16.msra.mxu0 %v1165
        %1269 = vmatpush.bf16.msra.mxu0 %v1161
        %1270 = vmatpush.bf16.msra.mxu0 %v1157
        %1271 = vmatpush.bf16.msra.mxu0 %v1153
        %1272 = vmatpush.bf16.msra.mxu0 %v1149
        %1273 = vmatmul.bf16.gmra.mxu0 %v1034
        %v1274 = vpop.f32.mrf.mxu0
        %v1275 = vadd.f32 %v1005, %v1274
        %v1276 = vpop.f32.mrf.mxu0
        %v1277 = vadd.f32 %v1010, %v1276
        %1278 = vmatmul.bf16.gmra.mxu0 %v1036
        %v1279 = vpop.f32.mrf.mxu0
        %v1280 = vadd.f32 %v1015, %v1279
        %v1281 = vpop.f32.mrf.mxu0
        %v1282 = vadd.f32 %v1020, %v1281
        %1283 = vdwg.mxu0
        %1284 = vmatpush.bf16.msra.mxu0 0
        %1285 = vmatpush.bf16.msra.mxu0 0
        %1286 = vmatpush.bf16.msra.mxu0 0
        %1287 = vmatpush.bf16.msra.mxu0 0
        %1288 = vmatpush.bf16.msra.mxu0 0
        %1289 = vmatpush.bf16.msra.mxu0 0
        %1290 = vmatpush.bf16.msra.mxu0 0
        %1291 = vmatpush.bf16.msra.mxu0 %v1181
        %1292 = vmatmul.bf16.gmra.mxu0 %v1222
        %v1293 = vpop.f32.mrf.mxu0
        %v1294 = vadd.f32 %v1275, %v1293
        %v1295 = vpop.f32.mrf.mxu0
        %v1296 = vadd.f32 %v1277, %v1295
        %1297 = vmatmul.bf16.gmra.mxu0 %v1225
        %v1298 = vpop.f32.mrf.mxu0
        %v1299 = vadd.f32 %v1280, %v1298
        %v1300 = vpop.f32.mrf.mxu0
        %v1301 = vadd.f32 %v1282, %v1300
        %1302 = vdwg.mxu0
        %1303 = vmatpush.bf16.msra.mxu0 %v1178
        %1304 = vmatpush.bf16.msra.mxu0 %v1174
        %1305 = vmatpush.bf16.msra.mxu0 %v1170
        %1306 = vmatpush.bf16.msra.mxu0 %v1166
        %1307 = vmatpush.bf16.msra.mxu0 %v1162
        %1308 = vmatpush.bf16.msra.mxu0 %v1158
        %1309 = vmatpush.bf16.msra.mxu0 %v1154
        %1310 = vmatpush.bf16.msra.mxu0 %v1150
        %1311 = vmatmul.bf16.gmra.mxu0 %v1034
        %v1312 = vpop.f32.mrf.mxu0
        %v1313 = vadd.f32 %v1005, %v1312
        %v1314 = vpop.f32.mrf.mxu0
        %v1315 = vadd.f32 %v1010, %v1314
        %1316 = vmatmul.bf16.gmra.mxu0 %v1036
        %v1317 = vpop.f32.mrf.mxu0
        %v1318 = vadd.f32 %v1015, %v1317
        %v1319 = vpop.f32.mrf.mxu0
        %v1320 = vadd.f32 %v1020, %v1319
        %1321 = vdwg.mxu0
        %1322 = vmatpush.bf16.msra.mxu0 0
        %1323 = vmatpush.bf16.msra.mxu0 0
        %1324 = vmatpush.bf16.msra.mxu0 0
        %1325 = vmatpush.bf16.msra.mxu0 0
        %1326 = vmatpush.bf16.msra.mxu0 0
        %1327 = vmatpush.bf16.msra.mxu0 0
        %1328 = vmatpush.bf16.msra.mxu0 0
        %1329 = vmatpush.bf16.msra.mxu0 %v1182
        %1330 = vmatmul.bf16.gmra.mxu0 %v1222
        %v1331 = vpop.f32.mrf.mxu0
        %v1332 = vadd.f32 %v1313, %v1331
        %v1333 = vpop.f32.mrf.mxu0
        %v1334 = vadd.f32 %v1315, %v1333
        %1335 = vmatmul.bf16.gmra.mxu0 %v1225
        %v1336 = vpop.f32.mrf.mxu0
        %v1337 = vadd.f32 %v1318, %v1336
        %v1338 = vpop.f32.mrf.mxu0
        %v1339 = vadd.f32 %v1320, %v1338
        %1340 = vdwg.mxu0
        %1341 = vmatpush.bf16.msra.mxu0 %v1179
        %1342 = vmatpush.bf16.msra.mxu0 %v1175
        %1343 = vmatpush.bf16.msra.mxu0 %v1171
        %1344 = vmatpush.bf16.msra.mxu0 %v1167
        %1345 = vmatpush.bf16.msra.mxu0 %v1163
        %1346 = vmatpush.bf16.msra.mxu0 %v1159
        %1347 = vmatpush.bf16.msra.mxu0 %v1155
        %1348 = vmatpush.bf16.msra.mxu0 %v1151
        %1349 = vmatmul.bf16.gmra.mxu0 %v1034
        %v1350 = vpop.f32.mrf.mxu0
        %v1351 = vadd.f32 %v1005, %v1350
        %v1352 = vpop.f32.mrf.mxu0
        %v1353 = vadd.f32 %v1010, %v1352
        %1354 = vmatmul.bf16.gmra.mxu0 %v1036
        %v1355 = vpop.f32.mrf.mxu0
        %v1356 = vadd.f32 %v1015, %v1355
        %v1357 = vpop.f32.mrf.mxu0
        %v1358 = vadd.f32 %v1020, %v1357
        %1359 = vdwg.mxu0
        %1360 = vmatpush.bf16.msra.mxu0 0
        %1361 = vmatpush.bf16.msra.mxu0 0
        %1362 = vmatpush.bf16.msra.mxu0 0
        %1363 = vmatpush.bf16.msra.mxu0 0
        %1364 = vmatpush.bf16.msra.mxu0 0
        %1365 = vmatpush.bf16.msra.mxu0 0
        %1366 = vmatpush.bf16.msra.mxu0 0
        %1367 = vmatpush.bf16.msra.mxu0 %v1183
        %1368 = vmatmul.bf16.gmra.mxu0 %v1222
        %v1369 = vpop.f32.mrf.mxu0
        %v1370 = vadd.f32 %v1351, %v1369
        %v1371 = vpop.f32.mrf.mxu0
        %v1372 = vadd.f32 %v1353, %v1371
        %1373 = vmatmul.bf16.gmra.mxu0 %v1225
        %v1374 = vpop.f32.mrf.mxu0
        %v1375 = vadd.f32 %v1356, %v1374
        %v1376 = vpop.f32.mrf.mxu0
        %v1377 = vadd.f32 %v1358, %v1376
        %1378 = vdwg.mxu0
        %v1379 = vxor.u32 %v1256, 2147483648
        %v1380 = vxor.u32 %v1294, 2147483648
        %v1381 = vxor.u32 %v1332, 2147483648
        %v1382 = vxor.u32 %v1370, 2147483648
        %v1383 = vmul.f32 %v1379, 1.442695
        %v1384 = vpow.pop %v1383
        %v1385 = vmul.f32 %v1380, 1.442695
        %v1386 = vpow.pop %v1385
        %v1387 = vmul.f32 %v1381, 1.442695
        %v1388 = vpow.pop %v1387
        %v1389 = vmul.f32 %v1382, 1.442695
        %v1390 = vpow.pop %v1389
        %v1391 = vadd.f32 %v1384, 1.0
        %v1392 = vadd.f32 %v1386, 1.0
        %v1393 = vadd.f32 %v1388, 1.0
        %v1394 = vadd.f32 %v1390, 1.0
        %v1395 = vrcp.pop %v1391
        %v1396 = vmul.f32 %v1391, %v1395
        %v1397 = vsub.f32 1.0, %v1396
        %v1398 = vmul.f32 %v1395, %v1397
        %v1399 = vadd.f32 %v1395, %v1398
        %vm1400 = vweird.f32 %v1391
        %vm1401 = vweird.f32 %v1395
        %vm1402 = vmor %vm1400, %vm1401
        %v1403 = vsel %vm1402, %v1395, %v1399
        %v1404 = vand.u32 2147483647, %v1391
        %vm1405 = vcmp.eq.f32.partialorder %v1404, 8.507059e+37
        %v1406 = vand.u32 %v1391, 2147483648
        %v1407 = vor.u32 1.1754944e-38, %v1406
        %v1408 = vsel %vm1405, %v1407, %v1403
        %v1409 = vmul.f32 1.0, %v1408
        %v1410 = vrcp.pop %v1392
        %v1411 = vmul.f32 %v1392, %v1410
        %v1412 = vsub.f32 1.0, %v1411
        %v1413 = vmul.f32 %v1410, %v1412
        %v1414 = vadd.f32 %v1410, %v1413
        %vm1415 = vweird.f32 %v1392
        %vm1416 = vweird.f32 %v1410
        %vm1417 = vmor %vm1415, %vm1416
        %v1418 = vsel %vm1417, %v1410, %v1414
        %v1419 = vand.u32 2147483647, %v1392
        %vm1420 = vcmp.eq.f32.partialorder %v1419, 8.507059e+37
        %v1421 = vand.u32 %v1392, 2147483648
        %v1422 = vor.u32 1.1754944e-38, %v1421
        %v1423 = vsel %vm1420, %v1422, %v1418
        %v1424 = vmul.f32 1.0, %v1423
        %v1425 = vrcp.pop %v1393
        %v1426 = vmul.f32 %v1393, %v1425
        %v1427 = vsub.f32 1.0, %v1426
        %v1428 = vmul.f32 %v1425, %v1427
        %v1429 = vadd.f32 %v1425, %v1428
        %vm1430 = vweird.f32 %v1393
        %vm1431 = vweird.f32 %v1425
        %vm1432 = vmor %vm1430, %vm1431
        %v1433 = vsel %vm1432, %v1425, %v1429
        %v1434 = vand.u32 2147483647, %v1393
        %vm1435 = vcmp.eq.f32.partialorder %v1434, 8.507059e+37
        %v1436 = vand.u32 %v1393, 2147483648
        %v1437 = vor.u32 1.1754944e-38, %v1436
        %v1438 = vsel %vm1435, %v1437, %v1433
        %v1439 = vmul.f32 1.0, %v1438
        %v1440 = vrcp.pop %v1394
        %v1441 = vmul.f32 %v1394, %v1440
        %v1442 = vsub.f32 1.0, %v1441
        %v1443 = vmul.f32 %v1440, %v1442
        %v1444 = vadd.f32 %v1440, %v1443
        %vm1445 = vweird.f32 %v1394
        %vm1446 = vweird.f32 %v1440
        %vm1447 = vmor %vm1445, %vm1446
        %v1448 = vsel %vm1447, %v1440, %v1444
        %v1449 = vand.u32 2147483647, %v1394
        %vm1450 = vcmp.eq.f32.partialorder %v1449, 8.507059e+37
        %v1451 = vand.u32 %v1394, 2147483648
        %v1452 = vor.u32 1.1754944e-38, %v1451
        %v1453 = vsel %vm1450, %v1452, %v1448
        %v1454 = vmul.f32 1.0, %v1453
        %v1455 = vxor.u32 %v1258, 2147483648
        %v1456 = vxor.u32 %v1296, 2147483648
        %v1457 = vxor.u32 %v1334, 2147483648
        %v1458 = vxor.u32 %v1372, 2147483648
        %v1459 = vmul.f32 %v1455, 1.442695
        %v1460 = vpow.pop %v1459
        %v1461 = vmul.f32 %v1456, 1.442695
        %v1462 = vpow.pop %v1461
        %v1463 = vmul.f32 %v1457, 1.442695
        %v1464 = vpow.pop %v1463
        %v1465 = vmul.f32 %v1458, 1.442695
        %v1466 = vpow.pop %v1465
        %v1467 = vadd.f32 %v1460, 1.0
        %v1468 = vadd.f32 %v1462, 1.0
        %v1469 = vadd.f32 %v1464, 1.0
        %v1470 = vadd.f32 %v1466, 1.0
        %v1471 = vrcp.pop %v1467
        %v1472 = vmul.f32 %v1467, %v1471
        %v1473 = vsub.f32 1.0, %v1472
        %v1474 = vmul.f32 %v1471, %v1473
        %v1475 = vadd.f32 %v1471, %v1474
        %vm1476 = vweird.f32 %v1467
        %vm1477 = vweird.f32 %v1471
        %vm1478 = vmor %vm1476, %vm1477
        %v1479 = vsel %vm1478, %v1471, %v1475
        %v1480 = vand.u32 2147483647, %v1467
        %vm1481 = vcmp.eq.f32.partialorder %v1480, 8.507059e+37
        %v1482 = vand.u32 %v1467, 2147483648
        %v1483 = vor.u32 1.1754944e-38, %v1482
        %v1484 = vsel %vm1481, %v1483, %v1479
        %v1485 = vmul.f32 1.0, %v1484
        %v1486 = vrcp.pop %v1468
        %v1487 = vmul.f32 %v1468, %v1486
        %v1488 = vsub.f32 1.0, %v1487
        %v1489 = vmul.f32 %v1486, %v1488
        %v1490 = vadd.f32 %v1486, %v1489
        %vm1491 = vweird.f32 %v1468
        %vm1492 = vweird.f32 %v1486
        %vm1493 = vmor %vm1491, %vm1492
        %v1494 = vsel %vm1493, %v1486, %v1490
        %v1495 = vand.u32 2147483647, %v1468
        %vm1496 = vcmp.eq.f32.partialorder %v1495, 8.507059e+37
        %v1497 = vand.u32 %v1468, 2147483648
        %v1498 = vor.u32 1.1754944e-38, %v1497
        %v1499 = vsel %vm1496, %v1498, %v1494
        %v1500 = vmul.f32 1.0, %v1499
        %v1501 = vrcp.pop %v1469
        %v1502 = vmul.f32 %v1469, %v1501
        %v1503 = vsub.f32 1.0, %v1502
        %v1504 = vmul.f32 %v1501, %v1503
        %v1505 = vadd.f32 %v1501, %v1504
        %vm1506 = vweird.f32 %v1469
        %vm1507 = vweird.f32 %v1501
        %vm1508 = vmor %vm1506, %vm1507
        %v1509 = vsel %vm1508, %v1501, %v1505
        %v1510 = vand.u32 2147483647, %v1469
        %vm1511 = vcmp.eq.f32.partialorder %v1510, 8.507059e+37
        %v1512 = vand.u32 %v1469, 2147483648
        %v1513 = vor.u32 1.1754944e-38, %v1512
        %v1514 = vsel %vm1511, %v1513, %v1509
        %v1515 = vmul.f32 1.0, %v1514
        %v1516 = vrcp.pop %v1470
        %v1517 = vmul.f32 %v1470, %v1516
        %v1518 = vsub.f32 1.0, %v1517
        %v1519 = vmul.f32 %v1516, %v1518
        %v1520 = vadd.f32 %v1516, %v1519
        %vm1521 = vweird.f32 %v1470
        %vm1522 = vweird.f32 %v1516
        %vm1523 = vmor %vm1521, %vm1522
        %v1524 = vsel %vm1523, %v1516, %v1520
        %v1525 = vand.u32 2147483647, %v1470
        %vm1526 = vcmp.eq.f32.partialorder %v1525, 8.507059e+37
        %v1527 = vand.u32 %v1470, 2147483648
        %v1528 = vor.u32 1.1754944e-38, %v1527
        %v1529 = vsel %vm1526, %v1528, %v1524
        %v1530 = vmul.f32 1.0, %v1529
        %v1531 = vxor.u32 %v1261, 2147483648
        %v1532 = vxor.u32 %v1299, 2147483648
        %v1533 = vxor.u32 %v1337, 2147483648
        %v1534 = vxor.u32 %v1375, 2147483648
        %v1535 = vmul.f32 %v1531, 1.442695
        %v1536 = vpow.pop %v1535
        %v1537 = vmul.f32 %v1532, 1.442695
        %v1538 = vpow.pop %v1537
        %v1539 = vmul.f32 %v1533, 1.442695
        %v1540 = vpow.pop %v1539
        %v1541 = vmul.f32 %v1534, 1.442695
        %v1542 = vpow.pop %v1541
        %v1543 = vadd.f32 %v1536, 1.0
        %v1544 = vadd.f32 %v1538, 1.0
        %v1545 = vadd.f32 %v1540, 1.0
        %v1546 = vadd.f32 %v1542, 1.0
        %v1547 = vrcp.pop %v1543
        %v1548 = vmul.f32 %v1543, %v1547
        %v1549 = vsub.f32 1.0, %v1548
        %v1550 = vmul.f32 %v1547, %v1549
        %v1551 = vadd.f32 %v1547, %v1550
        %vm1552 = vweird.f32 %v1543
        %vm1553 = vweird.f32 %v1547
        %vm1554 = vmor %vm1552, %vm1553
        %v1555 = vsel %vm1554, %v1547, %v1551
        %v1556 = vand.u32 2147483647, %v1543
        %vm1557 = vcmp.eq.f32.partialorder %v1556, 8.507059e+37
        %v1558 = vand.u32 %v1543, 2147483648
        %v1559 = vor.u32 1.1754944e-38, %v1558
        %v1560 = vsel %vm1557, %v1559, %v1555
        %v1561 = vmul.f32 1.0, %v1560
        %v1562 = vrcp.pop %v1544
        %v1563 = vmul.f32 %v1544, %v1562
        %v1564 = vsub.f32 1.0, %v1563
        %v1565 = vmul.f32 %v1562, %v1564
        %v1566 = vadd.f32 %v1562, %v1565
        %vm1567 = vweird.f32 %v1544
        %vm1568 = vweird.f32 %v1562
        %vm1569 = vmor %vm1567, %vm1568
        %v1570 = vsel %vm1569, %v1562, %v1566
        %v1571 = vand.u32 2147483647, %v1544
        %vm1572 = vcmp.eq.f32.partialorder %v1571, 8.507059e+37
        %v1573 = vand.u32 %v1544, 2147483648
        %v1574 = vor.u32 1.1754944e-38, %v1573
        %v1575 = vsel %vm1572, %v1574, %v1570
        %v1576 = vmul.f32 1.0, %v1575
        %v1577 = vrcp.pop %v1545
        %v1578 = vmul.f32 %v1545, %v1577
        %v1579 = vsub.f32 1.0, %v1578
        %v1580 = vmul.f32 %v1577, %v1579
        %v1581 = vadd.f32 %v1577, %v1580
        %vm1582 = vweird.f32 %v1545
        %vm1583 = vweird.f32 %v1577
        %vm1584 = vmor %vm1582, %vm1583
        %v1585 = vsel %vm1584, %v1577, %v1581
        %v1586 = vand.u32 2147483647, %v1545
        %vm1587 = vcmp.eq.f32.partialorder %v1586, 8.507059e+37
        %v1588 = vand.u32 %v1545, 2147483648
        %v1589 = vor.u32 1.1754944e-38, %v1588
        %v1590 = vsel %vm1587, %v1589, %v1585
        %v1591 = vmul.f32 1.0, %v1590
        %v1592 = vrcp.pop %v1546
        %v1593 = vmul.f32 %v1546, %v1592
        %v1594 = vsub.f32 1.0, %v1593
        %v1595 = vmul.f32 %v1592, %v1594
        %v1596 = vadd.f32 %v1592, %v1595
        %vm1597 = vweird.f32 %v1546
        %vm1598 = vweird.f32 %v1592
        %vm1599 = vmor %vm1597, %vm1598
        %v1600 = vsel %vm1599, %v1592, %v1596
        %v1601 = vand.u32 2147483647, %v1546
        %vm1602 = vcmp.eq.f32.partialorder %v1601, 8.507059e+37
        %v1603 = vand.u32 %v1546, 2147483648
        %v1604 = vor.u32 1.1754944e-38, %v1603
        %v1605 = vsel %vm1602, %v1604, %v1600
        %v1606 = vmul.f32 1.0, %v1605
        %v1607 = vtanh.pop %v1263
        %v1608 = vtanh.pop %v1301
        %v1609 = vtanh.pop %v1339
        %v1610 = vtanh.pop %v1377
        %v1611 = vld [vmem:[%s627] sm:$0xff]
        %v1612 = vld [vmem:[%s627 + $0x8] sm:$0xff]
        %v1613 = vld [vmem:[%s627 + $0x10] sm:$0xff]
        %v1614 = vld [vmem:[%s627 + $0x18] sm:$0xff]
        %v1615 = vmul.f32 %v1409, %v1611
        %v1616 = vmul.f32 %v1424, %v1612
        %v1617 = vmul.f32 %v1439, %v1613
        %v1618 = vmul.f32 %v1454, %v1614
        %v1619 = vmul.f32 %v1485, %v1607
        %v1620 = vmul.f32 %v1500, %v1608
        %v1621 = vmul.f32 %v1515, %v1609
        %v1622 = vmul.f32 %v1530, %v1610
        %v1623 = vadd.f32 %v1615, %v1619
        %v1624 = vadd.f32 %v1616, %v1620
        %v1625 = vadd.f32 %v1617, %v1621
        %v1626 = vadd.f32 %v1618, %v1622
        %v1627 = vtanh.pop %v1623
        %v1628 = vtanh.pop %v1624
        %v1629 = vtanh.pop %v1625
        %v1630 = vtanh.pop %v1626
        %v1631 = vmul.f32 %v1561, %v1627
        %v1632 = vmul.f32 %v1576, %v1628
        %v1633 = vmul.f32 %v1591, %v1629
        %v1634 = vmul.f32 %v1606, %v1630
        %1635 = vst [vmem:[%s640] sm:$0xff] %v1623
        %1636 = vst [vmem:[%s640 + $0x8] sm:$0xff] %v1624
        %1637 = vst [vmem:[%s640 + $0x10] sm:$0xff] %v1625
        %1638 = vst [vmem:[%s640 + $0x18] sm:$0xff] %v1626
        %1639 = vst [vmem:[%s646] sm:$0xff] %v1631
        %1640 = vst [vmem:[%s646 + $0x8] sm:$0xff] %v1632
        %1641 = vst [vmem:[%s646 + $0x10] sm:$0xff] %v1633
        %1642 = vst [vmem:[%s646 + $0x18] sm:$0xff] %v1634
        %s1643 = smul.u32 4, %s18
        %p1644 = scmp.lt.s32.totalorder %s1643, 7
        %s1645 = scalar_select %p1644, %s1643, 7
        %s1646 = smul.addr %s1645, 8
        %s1647 = scalar_lea.vmem %s5, %s1646
        %s1648 = smul.u32 4, %s18
        %p1649 = scmp.lt.s32.totalorder %s1648, 7
        %s1650 = scalar_select %p1649, %s1648, 7
        %s1651 = smul.addr %s1650, 8
        %s1652 = scalar_lea.vmem %s6, %s1651
        // Predicated region
        $region148: #{conv_lstm_forward.1} parent=138 // pred_check
          %p1653 = pneg %p160
        $region149: #{conv_lstm_forward.1} parent=138 // pred_check_branch
          %1655 = sbr.rel (%p1653) target = $region151
        $region150: #{conv_lstm_forward.1} parent=138 // pred_region
          %s1656 = smul.u32 4, %s18
        $region151: #{conv_lstm_forward.1} parent=138 // pred_fallthru
          _
        // Predicated region
        $region152: #{conv_lstm_forward.1} parent=138 // pred_check
          %p1657 = pneg %p186
        $region153: #{conv_lstm_forward.1} parent=138 // pred_check_branch
          %1659 = sbr.rel (%p1657) target = $region155
        $region154: #{conv_lstm_forward.1} parent=138 // pred_region
          %s1660 = smul.u32 4, %s18
        $region155: #{conv_lstm_forward.1} parent=138 // pred_fallthru
          _
      $region139: #{conv_lstm_forward.1} parent=5 // pred_fallthru
        _
      %p1661 = scmp.le.s32.totalorder 2, %s13
      // Predicated region
      $region156: #{conv_lstm_forward.1} parent=5 // pred_check
        %p1662 = pneg %p1661
      $region157: #{conv_lstm_forward.1} parent=5 // pred_check_branch
        %1664 = sbr.rel (%p1662) target = $region159
      $region158: #{conv_lstm_forward.1} parent=5 // pred_region
        %s1665 = ssub.s32 %s13, 2
        // Predicated region
        $region160: #{conv_lstm_forward.1} parent=158 // pred_check
          %p1666 = pneg %p166
        $region161: #{conv_lstm_forward.1} parent=158 // pred_check_branch
          %1668 = sbr.rel (%p1666) target = $region163
        $region162: #{conv_lstm_forward.1} parent=158 // pred_region
          %s1669 = smul.u32 4, %s19
          %p1670 = scmp.lt.s32.totalorder %s1669, 7
          %s1671 = scalar_select %p1670, %s1669, 7
          %s1672 = smul.addr %s1671, 8
          %s1673 = scalar_lea.vmem %s5, %s1672
        $region163: #{conv_lstm_forward.1} parent=158 // pred_fallthru
          _
        // Predicated region
        $region164: #{conv_lstm_forward.1} parent=158 // pred_check
          %p1674 = pneg %p192
        $region165: #{conv_lstm_forward.1} parent=158 // pred_check_branch
          %1676 = sbr.rel (%p1674) target = $region167
        $region166: #{conv_lstm_forward.1} parent=158 // pred_region
          %s1677 = smul.u32 4, %s19
          %p1678 = scmp.lt.s32.totalorder %s1677, 7
          %s1679 = scalar_select %p1678, %s1677, 7
          %s1680 = smul.addr %s1679, 8
          %s1681 = scalar_lea.vmem %s6, %s1680
        $region167: #{conv_lstm_forward.1} parent=158 // pred_fallthru
          _
      $region159: #{conv_lstm_forward.1} parent=5 // pred_fallthru
        _
    $region6: #{conv_lstm_forward.1} parent=1 // loop_footer
      %s17 = sadd.s32 1, %s13
    $region7: #{conv_lstm_forward.1} parent=1 // loop_footer_branch
      %12 = sbr.rel target = $region3
    $region8: #{conv_lstm_forward.1} parent=1 // loop_exit
      _

</llo_original>
